<compile_context>
chip_gen: v6e
topology: v6e:2x2x1
jax: 0.10.0
libtpu: 0.0.40
codegen_flags: <defaults>
</compile_context>

<pallas_src>
import functools
import math

import jax
import jax.numpy as jnp
from jax import lax
from jax.experimental import pallas as pl
from jax.experimental.pallas import tpu as pltpu  # noqa: F401  (TPU backend)

# TODO(synk): detail.safe_log epsilon is not available in the source; 1e-12 assumed.
_EPS = 1e-12


def _soft_triplet_kernel(src_ref, emb_ref, out_ref, *, tau, beta, n, eps):
    inv_tau = 1.0 / tau
    inv_beta = 1.0 / beta
    log_eps = math.log(eps)

    row_ids = lax.broadcasted_iota(jnp.int32, (n, n), 0)
    col_ids = lax.broadcasted_iota(jnp.int32, (n, n), 1)
    eye = row_ids == col_ids

    def _pairwise_dist(x_ref, normalize):
        # A @ A.T without materializing the transpose: contract dim 1 of both
        # operands on the MXU, f32 accumulate, operands left in input dtype.
        x = x_ref[...]
        gram = lax.dot_general(x, x, (((1,), (1,)), ((), ())),
                               preferred_element_type=jnp.float32)
        diag = jnp.where(eye, gram, 0.0)
        sq_col = jnp.sum(diag, axis=1, keepdims=True)   # (n, 1)  ||x_i||^2
        sq_row = jnp.sum(diag, axis=0, keepdims=True)   # (1, n)  no (n,1)->(1,n) transpose
        if normalize:
            # Euclidean distance between L2-normalized rows, straight from the
            # raw Gram (rsqrt on the EUP, no explicit normalization pass).
            cos = (gram * lax.rsqrt(jnp.maximum(sq_col, eps))
                        * lax.rsqrt(jnp.maximum(sq_row, eps)))
            d2 = 2.0 - 2.0 * cos
        else:
            d2 = sq_col + sq_row - 2.0 * gram
        # TODO(synk): forward-only; add an epsilon before sqrt if a backward
        # pass is ever added (d2 == 0 on the diagonal).
        return jnp.sqrt(jnp.maximum(d2, 0.0))

    # --- detail.calculate_source_similarities(source_embeddings.detach()) ---
    # TODO(synk): exact `detail` semantics unavailable; "source_avg_distances"
    # is taken as pairwise Euclidean distances normalized by the mean
    # off-diagonal distance (relational / RKD-style normalization).
    dist_src = _pairwise_dist(src_ref, normalize=False)                 # (n, n)
    off_sum = jnp.sum(jnp.where(eye, 0.0, dist_src), axis=1, keepdims=True)
    off_sum = jnp.sum(off_sum, axis=0, keepdims=True)                   # (1, 1)
    mean_off = off_sum * (1.0 / float(n * (n - 1)))
    s_mat = dist_src * (1.0 / jnp.maximum(mean_off, eps))               # symmetric

    # --- detail.calculate_similarities_pt(embeddings) ---
    # TODO(synk): exact `detail` semantics unavailable; "distances" is taken as
    # pairwise Euclidean distances of the unit-normalized embeddings.
    d_mat = _pairwise_dist(emb_ref, normalize=True)                     # symmetric

    # --- per-anchor triplet losses; (n, n, n) tensor never materialized ------
    def anchor_body(a, acc):
        row_mask = row_ids == a
        col_mask = col_ids == a
        # S[a, k] along lanes and S[a, j] along sublanes.  The sublane-oriented
        # copy uses the symmetry S[a, j] == S[j, a] + a masked lane reduce, so
        # no per-anchor transpose / relayout is needed.
        row_s = jnp.sum(jnp.where(row_mask, s_mat, 0.0), axis=0, keepdims=True)  # (1, n)
        col_s = jnp.sum(jnp.where(col_mask, s_mat, 0.0), axis=1, keepdims=True)  # (n, 1)
        row_d = jnp.sum(jnp.where(row_mask, d_mat, 0.0), axis=0, keepdims=True)
        col_d = jnp.sum(jnp.where(col_mask, d_mat, 0.0), axis=1, keepdims=True)

        sdd = row_s - col_s            # (n, n): S[a, k] - S[a, j]
        tdd = row_d - col_d            # (n, n): D[a, k] - D[a, j]

        z = sdd * inv_beta
        e = jnp.exp(-z)                               # == 1/sigmoid(z) - 1 (exact math)
        alpha = 1.0 / (1.0 + e)                       # torch.sigmoid(sdd / beta)
        # safe_log(1/alpha - 1)/tau == log(max(exp(-z), eps))/tau == max(-z, log eps)/tau
        gamma = jnp.maximum(-z, log_eps) * inv_tau

        x = sdd - tdd + gamma
        tx = tau * x
        t = (alpha * jnp.log(jnp.maximum(1.0 + jnp.exp(tx), eps))
             + (1.0 - alpha) * jnp.log(jnp.maximum(1.0 + jnp.exp(-tx), eps)))

        part = jnp.sum(t, axis=1, keepdims=True)      # (n, 1) lane reduce
        part = jnp.sum(part, axis=0, keepdims=True)   # (1, 1) sublane reduce
        return acc + part

    total = lax.fori_loop(0, n, anchor_body, jnp.zeros((1, 1), jnp.float32),
                          unroll=(n <= 16))

    # fold the 1/tau and the mean over all n^3 triplets into one constant
    out_ref[...] = total * (inv_tau / float(n * n * n))


def soft_triplet_margin_regression_loss(source_embeddings, embeddings, *,
                                        tau, beta):
    """Forward pass of SoftTripletMarginRegressionLoss (batch_mining=None path)."""
    n, ds = source_embeddings.shape
    n2, d = embeddings.shape
    assert n == n2, "batch sizes must match"
    assert n >= 2, "need at least two embeddings"

    # source_embeddings.detach()
    src = jax.lax.stop_gradient(source_embeddings)
    # TODO(synk): no custom_vjp is defined; pallas_call is not differentiable on
    # TPU, so this is a forward-only implementation of the loss value.

    kernel = functools.partial(_soft_triplet_kernel, tau=float(tau),
                               beta=float(beta), n=n, eps=_EPS)
    out = pl.pallas_call(
        kernel,
        out_shape=jax.ShapeDtypeStruct((1, 1), jnp.float32),
        in_specs=[pl.BlockSpec((n, ds), lambda: (0, 0)),
                  pl.BlockSpec((n, d), lambda: (0, 0))],
        out_specs=pl.BlockSpec((1, 1), lambda: (0, 0)),
    )(src, embeddings)
    return out[0, 0]


def _reference_loss(src, emb, tau, beta, eps=_EPS):
    """Pure-JAX reference following the literal PyTorch op sequence."""
    src = jnp.asarray(src, jnp.float32)
    emb = jnp.asarray(emb, jnp.float32)
    n = src.shape[0]
    eye = jnp.eye(n, dtype=bool)

    # source_avg_distances
    sq_s = jnp.sum(src * src, axis=1, keepdims=True)
    dist_s = jnp.sqrt(jnp.maximum(sq_s + sq_s.T - 2.0 * (src @ src.T), 0.0))
    mean_off = jnp.sum(jnp.where(eye, 0.0, dist_s)) / (n * (n - 1))
    s_mat = dist_s / jnp.maximum(mean_off, eps)

    # distances of L2-normalized embeddings
    sq_e = jnp.sum(emb * emb, axis=1, keepdims=True)
    inv_norm = jax.lax.rsqrt(jnp.maximum(sq_e, eps))
    cos = (emb @ emb.T) * inv_norm * inv_norm.T
    d_mat = jnp.sqrt(jnp.maximum(2.0 - 2.0 * cos, 0.0))

    sdd = s_mat[:, None, :] - s_mat[:, :, None]   # S[a,k] - S[a,j]
    tdd = d_mat[:, None, :] - d_mat[:, :, None]
    alpha = jax.nn.sigmoid(sdd / beta)
    gamma = jnp.log(jnp.maximum(1.0 / alpha - 1.0, eps)) / tau
    t1 = alpha * jnp.log(jnp.maximum(1.0 + jnp.exp(tau * (sdd - tdd + gamma)), eps))
    t2 = (1.0 - alpha) * jnp.log(jnp.maximum(1.0 + jnp.exp(tau * (tdd - sdd - gamma)), eps))
    return jnp.mean((t1 + t2) / tau)


if __name__ == "__main__":
    # args-equivalent hyperparameters (deterministic, in-script); batch_mining=None
    tau, beta = 5.0, 0.5

    # small shapes: batch N=8, source dim 64, target embedding dim 32
    key = jax.random.PRNGKey(0)
    k_src, k_emb = jax.random.split(key)
    source_embeddings = jax.random.normal(k_src, (8, 64), dtype=jnp.float32)
    embeddings = jax.random.normal(k_emb, (8, 32), dtype=jnp.float32)

    loss = soft_triplet_margin_regression_loss(
        source_embeddings, embeddings, tau=tau, beta=beta)
    loss = jax.block_until_ready(loss)

    ref = jax.block_until_ready(
        _reference_loss(source_embeddings, embeddings, tau, beta))

    assert jnp.isfinite(loss), f"non-finite loss: {loss}"
    assert jnp.allclose(loss, ref, rtol=2e-2, atol=2e-2), (loss, ref)
    print("KERNEL_OK")
</pallas_src>

<mosaic_0001>
module attributes {stable_mosaic.version = 11 : i64} {
  func.func @_soft_triplet_kernel(%arg0: memref<8x64xf32, #tpu.memory_space<vmem>>, %arg1: memref<8x32xf32, #tpu.memory_space<vmem>>, %arg2: memref<1x1xf32, #tpu.memory_space<vmem>>) attributes {dimension_semantics = [], scalar_prefetch = 0 : i64, scratch_operands = 0 : i64, tpu.core_type = #tpu.core_type<tc>} {
    %0 = tpu.iota {dimensions = array<i32: 0>} : vector<8x8xi32>
    %1 = tpu.iota {dimensions = array<i32: 1>} : vector<8x8xi32>
    %2 = arith.cmpi eq, %0, %1 : vector<8x8xi32>
    %c0 = arith.constant 0 : index
    %c0_0 = arith.constant 0 : index
    %3 = vector.load %arg0[%c0, %c0_0] : memref<8x64xf32, #tpu.memory_space<vmem>>, vector<8x64xf32>
    %cst = arith.constant dense<0.000000e+00> : vector<8x8xf32>
    %4 = tpu.matmul %3, %3, %cst {dimension_numbers = #tpu.dot_dimension_numbers<[1], [1], [0], [0], [0, 0, 1, 0], [], []>} : vector<8x64xf32>, vector<8x64xf32>, vector<8x8xf32> -> vector<8x8xf32>
    %cst_1 = arith.constant 0.000000e+00 : f32
    %5 = vector.broadcast %cst_1 : f32 to vector<8x8xf32>
    %6 = arith.select %2, %4, %5 : vector<8x8xi1>, vector<8x8xf32>
    %cst_2 = arith.constant dense<0.000000e+00> : vector<8xf32>
    %7 = vector.multi_reduction <add>, %6, %cst_2 [1] : vector<8x8xf32> to vector<8xf32>
    %8 = vector.shape_cast %7 : vector<8xf32> to vector<8x1xf32>
    %cst_3 = arith.constant dense<0.000000e+00> : vector<8xf32>
    %9 = vector.multi_reduction <add>, %6, %cst_3 [0] : vector<8x8xf32> to vector<8xf32>
    %10 = vector.shape_cast %9 : vector<8xf32> to vector<1x8xf32>
    %11 = vector.broadcast %8 : vector<8x1xf32> to vector<8x8xf32>
    %12 = vector.broadcast %10 : vector<1x8xf32> to vector<8x8xf32>
    %13 = arith.addf %11, %12 : vector<8x8xf32>
    %cst_4 = arith.constant 2.000000e+00 : f32
    %14 = vector.broadcast %cst_4 : f32 to vector<8x8xf32>
    %15 = arith.mulf %14, %4 : vector<8x8xf32>
    %16 = arith.subf %13, %15 : vector<8x8xf32>
    %cst_5 = arith.constant 0.000000e+00 : f32
    %17 = vector.broadcast %cst_5 : f32 to vector<8x8xf32>
    %18 = arith.maximumf %16, %17 : vector<8x8xf32>
    %19 = math.sqrt %18 : vector<8x8xf32>
    %cst_6 = arith.constant 0.000000e+00 : f32
    %20 = vector.broadcast %cst_6 : f32 to vector<8x8xf32>
    %21 = arith.select %2, %20, %19 : vector<8x8xi1>, vector<8x8xf32>
    %cst_7 = arith.constant dense<0.000000e+00> : vector<8xf32>
    %22 = vector.multi_reduction <add>, %21, %cst_7 [1] : vector<8x8xf32> to vector<8xf32>
    %23 = vector.shape_cast %22 : vector<8xf32> to vector<8x1xf32>
    %cst_8 = arith.constant dense<0.000000e+00> : vector<1xf32>
    %24 = vector.multi_reduction <add>, %23, %cst_8 [0] : vector<8x1xf32> to vector<1xf32>
    %25 = vector.shape_cast %24 : vector<1xf32> to vector<1x1xf32>
    %cst_9 = arith.constant 0.0178571437 : f32
    %26 = vector.broadcast %cst_9 : f32 to vector<1x1xf32>
    %27 = arith.mulf %25, %26 : vector<1x1xf32>
    %cst_10 = arith.constant 9.99999996E-13 : f32
    %28 = vector.broadcast %cst_10 : f32 to vector<1x1xf32>
    %29 = arith.maximumf %27, %28 : vector<1x1xf32>
    %cst_11 = arith.constant 1.000000e+00 : f32
    %30 = vector.broadcast %cst_11 : f32 to vector<1x1xf32>
    %31 = arith.divf %30, %29 : vector<1x1xf32>
    %32 = vector.broadcast %31 : vector<1x1xf32> to vector<8x8xf32>
    %33 = arith.mulf %19, %32 : vector<8x8xf32>
    %c0_12 = arith.constant 0 : index
    %c0_13 = arith.constant 0 : index
    %34 = vector.load %arg1[%c0_12, %c0_13] : memref<8x32xf32, #tpu.memory_space<vmem>>, vector<8x32xf32>
    %cst_14 = arith.constant dense<0.000000e+00> : vector<8x8xf32>
    %35 = tpu.matmul %34, %34, %cst_14 {dimension_numbers = #tpu.dot_dimension_numbers<[1], [1], [0], [0], [0, 0, 1, 0], [], []>} : vector<8x32xf32>, vector<8x32xf32>, vector<8x8xf32> -> vector<8x8xf32>
    %cst_15 = arith.constant 0.000000e+00 : f32
    %36 = vector.broadcast %cst_15 : f32 to vector<8x8xf32>
    %37 = arith.select %2, %35, %36 : vector<8x8xi1>, vector<8x8xf32>
    %cst_16 = arith.constant dense<0.000000e+00> : vector<8xf32>
    %38 = vector.multi_reduction <add>, %37, %cst_16 [1] : vector<8x8xf32> to vector<8xf32>
    %39 = vector.shape_cast %38 : vector<8xf32> to vector<8x1xf32>
    %cst_17 = arith.constant dense<0.000000e+00> : vector<8xf32>
    %40 = vector.multi_reduction <add>, %37, %cst_17 [0] : vector<8x8xf32> to vector<8xf32>
    %41 = vector.shape_cast %40 : vector<8xf32> to vector<1x8xf32>
    %cst_18 = arith.constant 9.99999996E-13 : f32
    %42 = vector.broadcast %cst_18 : f32 to vector<8x1xf32>
    %43 = arith.maximumf %39, %42 : vector<8x1xf32>
    %44 = math.rsqrt %43 : vector<8x1xf32>
    %45 = vector.broadcast %44 : vector<8x1xf32> to vector<8x8xf32>
    %46 = arith.mulf %35, %45 : vector<8x8xf32>
    %cst_19 = arith.constant 9.99999996E-13 : f32
    %47 = vector.broadcast %cst_19 : f32 to vector<1x8xf32>
    %48 = arith.maximumf %41, %47 : vector<1x8xf32>
    %49 = math.rsqrt %48 : vector<1x8xf32>
    %50 = vector.broadcast %49 : vector<1x8xf32> to vector<8x8xf32>
    %51 = arith.mulf %46, %50 : vector<8x8xf32>
    %cst_20 = arith.constant 2.000000e+00 : f32
    %52 = vector.broadcast %cst_20 : f32 to vector<8x8xf32>
    %53 = arith.mulf %52, %51 : vector<8x8xf32>
    %cst_21 = arith.constant 2.000000e+00 : f32
    %54 = vector.broadcast %cst_21 : f32 to vector<8x8xf32>
    %55 = arith.subf %54, %53 : vector<8x8xf32>
    %cst_22 = arith.constant 0.000000e+00 : f32
    %56 = vector.broadcast %cst_22 : f32 to vector<8x8xf32>
    %57 = arith.maximumf %55, %56 : vector<8x8xf32>
    %58 = math.sqrt %57 : vector<8x8xf32>
    %cst_23 = arith.constant 0.000000e+00 : f32
    %59 = vector.broadcast %cst_23 : f32 to vector<1x1xf32>
    %c0_i32 = arith.constant 0 : i32
    %60 = vector.broadcast %c0_i32 : i32 to vector<8x8xi32>
    %61 = arith.cmpi eq, %0, %60 : vector<8x8xi32>
    %62 = vector.broadcast %c0_i32 : i32 to vector<8x8xi32>
    %63 = arith.cmpi eq, %1, %62 : vector<8x8xi32>
    %cst_24 = arith.constant 0.000000e+00 : f32
    %64 = vector.broadcast %cst_24 : f32 to vector<8x8xf32>
    %65 = arith.select %61, %33, %64 : vector<8x8xi1>, vector<8x8xf32>
    %cst_25 = arith.constant dense<0.000000e+00> : vector<8xf32>
    %66 = vector.multi_reduction <add>, %65, %cst_25 [0] : vector<8x8xf32> to vector<8xf32>
    %67 = vector.shape_cast %66 : vector<8xf32> to vector<1x8xf32>
    %cst_26 = arith.constant 0.000000e+00 : f32
    %68 = vector.broadcast %cst_26 : f32 to vector<8x8xf32>
    %69 = arith.select %63, %33, %68 : vector<8x8xi1>, vector<8x8xf32>
    %cst_27 = arith.constant dense<0.000000e+00> : vector<8xf32>
    %70 = vector.multi_reduction <add>, %69, %cst_27 [1] : vector<8x8xf32> to vector<8xf32>
    %71 = vector.shape_cast %70 : vector<8xf32> to vector<8x1xf32>
    %cst_28 = arith.constant 0.000000e+00 : f32
    %72 = vector.broadcast %cst_28 : f32 to vector<8x8xf32>
    %73 = arith.select %61, %58, %72 : vector<8x8xi1>, vector<8x8xf32>
    %cst_29 = arith.constant dense<0.000000e+00> : vector<8xf32>
    %74 = vector.multi_reduction <add>, %73, %cst_29 [0] : vector<8x8xf32> to vector<8xf32>
    %75 = vector.shape_cast %74 : vector<8xf32> to vector<1x8xf32>
    %cst_30 = arith.constant 0.000000e+00 : f32
    %76 = vector.broadcast %cst_30 : f32 to vector<8x8xf32>
    %77 = arith.select %63, %58, %76 : vector<8x8xi1>, vector<8x8xf32>
    %cst_31 = arith.constant dense<0.000000e+00> : vector<8xf32>
    %78 = vector.multi_reduction <add>, %77, %cst_31 [1] : vector<8x8xf32> to vector<8xf32>
    %79 = vector.shape_cast %78 : vector<8xf32> to vector<8x1xf32>
    %80 = vector.broadcast %67 : vector<1x8xf32> to vector<8x8xf32>
    %81 = vector.broadcast %71 : vector<8x1xf32> to vector<8x8xf32>
    %82 = arith.subf %80, %81 : vector<8x8xf32>
    %83 = vector.broadcast %75 : vector<1x8xf32> to vector<8x8xf32>
    %84 = vector.broadcast %79 : vector<8x1xf32> to vector<8x8xf32>
    %85 = arith.subf %83, %84 : vector<8x8xf32>
    %cst_32 = arith.constant 2.000000e+00 : f32
    %86 = vector.broadcast %cst_32 : f32 to vector<8x8xf32>
    %87 = arith.mulf %82, %86 : vector<8x8xf32>
    %cst_33 = arith.constant 0.000000e+00 : f32
    %88 = vector.broadcast %cst_33 : f32 to vector<8x8xf32>
    %89 = arith.subf %88, %87 : vector<8x8xf32>
    %90 = math.exp %89 : vector<8x8xf32>
    %cst_34 = arith.constant 1.000000e+00 : f32
    %91 = vector.broadcast %cst_34 : f32 to vector<8x8xf32>
    %92 = arith.addf %91, %90 : vector<8x8xf32>
    %cst_35 = arith.constant 1.000000e+00 : f32
    %93 = vector.broadcast %cst_35 : f32 to vector<8x8xf32>
    %94 = arith.divf %93, %92 : vector<8x8xf32>
    %cst_36 = arith.constant 0.000000e+00 : f32
    %95 = vector.broadcast %cst_36 : f32 to vector<8x8xf32>
    %96 = arith.subf %95, %87 : vector<8x8xf32>
    %cst_37 = arith.constant -27.6310215 : f32
    %97 = vector.broadcast %cst_37 : f32 to vector<8x8xf32>
    %98 = arith.maximumf %96, %97 : vector<8x8xf32>
    %cst_38 = arith.constant 2.000000e-01 : f32
    %99 = vector.broadcast %cst_38 : f32 to vector<8x8xf32>
    %100 = arith.mulf %98, %99 : vector<8x8xf32>
    %101 = arith.subf %82, %85 : vector<8x8xf32>
    %102 = arith.addf %101, %100 : vector<8x8xf32>
    %cst_39 = arith.constant 5.000000e+00 : f32
    %103 = vector.broadcast %cst_39 : f32 to vector<8x8xf32>
    %104 = arith.mulf %103, %102 : vector<8x8xf32>
    %105 = math.exp %104 : vector<8x8xf32>
    %cst_40 = arith.constant 1.000000e+00 : f32
    %106 = vector.broadcast %cst_40 : f32 to vector<8x8xf32>
    %107 = arith.addf %106, %105 : vector<8x8xf32>
    %cst_41 = arith.constant 9.99999996E-13 : f32
    %108 = vector.broadcast %cst_41 : f32 to vector<8x8xf32>
    %109 = arith.maximumf %107, %108 : vector<8x8xf32>
    %110 = math.log %109 : vector<8x8xf32>
    %111 = arith.mulf %94, %110 : vector<8x8xf32>
    %cst_42 = arith.constant 1.000000e+00 : f32
    %112 = vector.broadcast %cst_42 : f32 to vector<8x8xf32>
    %113 = arith.subf %112, %94 : vector<8x8xf32>
    %cst_43 = arith.constant 0.000000e+00 : f32
    %114 = vector.broadcast %cst_43 : f32 to vector<8x8xf32>
    %115 = arith.subf %114, %104 : vector<8x8xf32>
    %116 = math.exp %115 : vector<8x8xf32>
    %cst_44 = arith.constant 1.000000e+00 : f32
    %117 = vector.broadcast %cst_44 : f32 to vector<8x8xf32>
    %118 = arith.addf %117, %116 : vector<8x8xf32>
    %cst_45 = arith.constant 9.99999996E-13 : f32
    %119 = vector.broadcast %cst_45 : f32 to vector<8x8xf32>
    %120 = arith.maximumf %118, %119 : vector<8x8xf32>
    %121 = math.log %120 : vector<8x8xf32>
    %122 = arith.mulf %113, %121 : vector<8x8xf32>
    %123 = arith.addf %111, %122 : vector<8x8xf32>
    %cst_46 = arith.constant dense<0.000000e+00> : vector<8xf32>
    %124 = vector.multi_reduction <add>, %123, %cst_46 [1] : vector<8x8xf32> to vector<8xf32>
    %125 = vector.shape_cast %124 : vector<8xf32> to vector<8x1xf32>
    %cst_47 = arith.constant dense<0.000000e+00> : vector<1xf32>
    %126 = vector.multi_reduction <add>, %125, %cst_47 [0] : vector<8x1xf32> to vector<1xf32>
    %127 = vector.shape_cast %126 : vector<1xf32> to vector<1x1xf32>
    %128 = arith.addf %59, %127 : vector<1x1xf32>
    %c1_i32 = arith.constant 1 : i32
    %129 = vector.broadcast %c1_i32 : i32 to vector<8x8xi32>
    %130 = arith.cmpi eq, %0, %129 : vector<8x8xi32>
    %131 = vector.broadcast %c1_i32 : i32 to vector<8x8xi32>
    %132 = arith.cmpi eq, %1, %131 : vector<8x8xi32>
    %cst_48 = arith.constant 0.000000e+00 : f32
    %133 = vector.broadcast %cst_48 : f32 to vector<8x8xf32>
    %134 = arith.select %130, %33, %133 : vector<8x8xi1>, vector<8x8xf32>
    %cst_49 = arith.constant dense<0.000000e+00> : vector<8xf32>
    %135 = vector.multi_reduction <add>, %134, %cst_49 [0] : vector<8x8xf32> to vector<8xf32>
    %136 = vector.shape_cast %135 : vector<8xf32> to vector<1x8xf32>
    %cst_50 = arith.constant 0.000000e+00 : f32
    %137 = vector.broadcast %cst_50 : f32 to vector<8x8xf32>
    %138 = arith.select %132, %33, %137 : vector<8x8xi1>, vector<8x8xf32>
    %cst_51 = arith.constant dense<0.000000e+00> : vector<8xf32>
    %139 = vector.multi_reduction <add>, %138, %cst_51 [1] : vector<8x8xf32> to vector<8xf32>
    %140 = vector.shape_cast %139 : vector<8xf32> to vector<8x1xf32>
    %cst_52 = arith.constant 0.000000e+00 : f32
    %141 = vector.broadcast %cst_52 : f32 to vector<8x8xf32>
    %142 = arith.select %130, %58, %141 : vector<8x8xi1>, vector<8x8xf32>
    %cst_53 = arith.constant dense<0.000000e+00> : vector<8xf32>
    %143 = vector.multi_reduction <add>, %142, %cst_53 [0] : vector<8x8xf32> to vector<8xf32>
    %144 = vector.shape_cast %143 : vector<8xf32> to vector<1x8xf32>
    %cst_54 = arith.constant 0.000000e+00 : f32
    %145 = vector.broadcast %cst_54 : f32 to vector<8x8xf32>
    %146 = arith.select %132, %58, %145 : vector<8x8xi1>, vector<8x8xf32>
    %cst_55 = arith.constant dense<0.000000e+00> : vector<8xf32>
    %147 = vector.multi_reduction <add>, %146, %cst_55 [1] : vector<8x8xf32> to vector<8xf32>
    %148 = vector.shape_cast %147 : vector<8xf32> to vector<8x1xf32>
    %149 = vector.broadcast %136 : vector<1x8xf32> to vector<8x8xf32>
    %150 = vector.broadcast %140 : vector<8x1xf32> to vector<8x8xf32>
    %151 = arith.subf %149, %150 : vector<8x8xf32>
    %152 = vector.broadcast %144 : vector<1x8xf32> to vector<8x8xf32>
    %153 = vector.broadcast %148 : vector<8x1xf32> to vector<8x8xf32>
    %154 = arith.subf %152, %153 : vector<8x8xf32>
    %cst_56 = arith.constant 2.000000e+00 : f32
    %155 = vector.broadcast %cst_56 : f32 to vector<8x8xf32>
    %156 = arith.mulf %151, %155 : vector<8x8xf32>
    %cst_57 = arith.constant 0.000000e+00 : f32
    %157 = vector.broadcast %cst_57 : f32 to vector<8x8xf32>
    %158 = arith.subf %157, %156 : vector<8x8xf32>
    %159 = math.exp %158 : vector<8x8xf32>
    %cst_58 = arith.constant 1.000000e+00 : f32
    %160 = vector.broadcast %cst_58 : f32 to vector<8x8xf32>
    %161 = arith.addf %160, %159 : vector<8x8xf32>
    %cst_59 = arith.constant 1.000000e+00 : f32
    %162 = vector.broadcast %cst_59 : f32 to vector<8x8xf32>
    %163 = arith.divf %162, %161 : vector<8x8xf32>
    %cst_60 = arith.constant 0.000000e+00 : f32
    %164 = vector.broadcast %cst_60 : f32 to vector<8x8xf32>
    %165 = arith.subf %164, %156 : vector<8x8xf32>
    %cst_61 = arith.constant -27.6310215 : f32
    %166 = vector.broadcast %cst_61 : f32 to vector<8x8xf32>
    %167 = arith.maximumf %165, %166 : vector<8x8xf32>
    %cst_62 = arith.constant 2.000000e-01 : f32
    %168 = vector.broadcast %cst_62 : f32 to vector<8x8xf32>
    %169 = arith.mulf %167, %168 : vector<8x8xf32>
    %170 = arith.subf %151, %154 : vector<8x8xf32>
    %171 = arith.addf %170, %169 : vector<8x8xf32>
    %cst_63 = arith.constant 5.000000e+00 : f32
    %172 = vector.broadcast %cst_63 : f32 to vector<8x8xf32>
    %173 = arith.mulf %172, %171 : vector<8x8xf32>
    %174 = math.exp %173 : vector<8x8xf32>
    %cst_64 = arith.constant 1.000000e+00 : f32
    %175 = vector.broadcast %cst_64 : f32 to vector<8x8xf32>
    %176 = arith.addf %175, %174 : vector<8x8xf32>
    %cst_65 = arith.constant 9.99999996E-13 : f32
    %177 = vector.broadcast %cst_65 : f32 to vector<8x8xf32>
    %178 = arith.maximumf %176, %177 : vector<8x8xf32>
    %179 = math.log %178 : vector<8x8xf32>
    %180 = arith.mulf %163, %179 : vector<8x8xf32>
    %cst_66 = arith.constant 1.000000e+00 : f32
    %181 = vector.broadcast %cst_66 : f32 to vector<8x8xf32>
    %182 = arith.subf %181, %163 : vector<8x8xf32>
    %cst_67 = arith.constant 0.000000e+00 : f32
    %183 = vector.broadcast %cst_67 : f32 to vector<8x8xf32>
    %184 = arith.subf %183, %173 : vector<8x8xf32>
    %185 = math.exp %184 : vector<8x8xf32>
    %cst_68 = arith.constant 1.000000e+00 : f32
    %186 = vector.broadcast %cst_68 : f32 to vector<8x8xf32>
    %187 = arith.addf %186, %185 : vector<8x8xf32>
    %cst_69 = arith.constant 9.99999996E-13 : f32
    %188 = vector.broadcast %cst_69 : f32 to vector<8x8xf32>
    %189 = arith.maximumf %187, %188 : vector<8x8xf32>
    %190 = math.log %189 : vector<8x8xf32>
    %191 = arith.mulf %182, %190 : vector<8x8xf32>
    %192 = arith.addf %180, %191 : vector<8x8xf32>
    %cst_70 = arith.constant dense<0.000000e+00> : vector<8xf32>
    %193 = vector.multi_reduction <add>, %192, %cst_70 [1] : vector<8x8xf32> to vector<8xf32>
    %194 = vector.shape_cast %193 : vector<8xf32> to vector<8x1xf32>
    %cst_71 = arith.constant dense<0.000000e+00> : vector<1xf32>
    %195 = vector.multi_reduction <add>, %194, %cst_71 [0] : vector<8x1xf32> to vector<1xf32>
    %196 = vector.shape_cast %195 : vector<1xf32> to vector<1x1xf32>
    %197 = arith.addf %128, %196 : vector<1x1xf32>
    %c2_i32 = arith.constant 2 : i32
    %198 = vector.broadcast %c2_i32 : i32 to vector<8x8xi32>
    %199 = arith.cmpi eq, %0, %198 : vector<8x8xi32>
    %200 = vector.broadcast %c2_i32 : i32 to vector<8x8xi32>
    %201 = arith.cmpi eq, %1, %200 : vector<8x8xi32>
    %cst_72 = arith.constant 0.000000e+00 : f32
    %202 = vector.broadcast %cst_72 : f32 to vector<8x8xf32>
    %203 = arith.select %199, %33, %202 : vector<8x8xi1>, vector<8x8xf32>
    %cst_73 = arith.constant dense<0.000000e+00> : vector<8xf32>
    %204 = vector.multi_reduction <add>, %203, %cst_73 [0] : vector<8x8xf32> to vector<8xf32>
    %205 = vector.shape_cast %204 : vector<8xf32> to vector<1x8xf32>
    %cst_74 = arith.constant 0.000000e+00 : f32
    %206 = vector.broadcast %cst_74 : f32 to vector<8x8xf32>
    %207 = arith.select %201, %33, %206 : vector<8x8xi1>, vector<8x8xf32>
    %cst_75 = arith.constant dense<0.000000e+00> : vector<8xf32>
    %208 = vector.multi_reduction <add>, %207, %cst_75 [1] : vector<8x8xf32> to vector<8xf32>
    %209 = vector.shape_cast %208 : vector<8xf32> to vector<8x1xf32>
    %cst_76 = arith.constant 0.000000e+00 : f32
    %210 = vector.broadcast %cst_76 : f32 to vector<8x8xf32>
    %211 = arith.select %199, %58, %210 : vector<8x8xi1>, vector<8x8xf32>
    %cst_77 = arith.constant dense<0.000000e+00> : vector<8xf32>
    %212 = vector.multi_reduction <add>, %211, %cst_77 [0] : vector<8x8xf32> to vector<8xf32>
    %213 = vector.shape_cast %212 : vector<8xf32> to vector<1x8xf32>
    %cst_78 = arith.constant 0.000000e+00 : f32
    %214 = vector.broadcast %cst_78 : f32 to vector<8x8xf32>
    %215 = arith.select %201, %58, %214 : vector<8x8xi1>, vector<8x8xf32>
    %cst_79 = arith.constant dense<0.000000e+00> : vector<8xf32>
    %216 = vector.multi_reduction <add>, %215, %cst_79 [1] : vector<8x8xf32> to vector<8xf32>
    %217 = vector.shape_cast %216 : vector<8xf32> to vector<8x1xf32>
    %218 = vector.broadcast %205 : vector<1x8xf32> to vector<8x8xf32>
    %219 = vector.broadcast %209 : vector<8x1xf32> to vector<8x8xf32>
    %220 = arith.subf %218, %219 : vector<8x8xf32>
    %221 = vector.broadcast %213 : vector<1x8xf32> to vector<8x8xf32>
    %222 = vector.broadcast %217 : vector<8x1xf32> to vector<8x8xf32>
    %223 = arith.subf %221, %222 : vector<8x8xf32>
    %cst_80 = arith.constant 2.000000e+00 : f32
    %224 = vector.broadcast %cst_80 : f32 to vector<8x8xf32>
    %225 = arith.mulf %220, %224 : vector<8x8xf32>
    %cst_81 = arith.constant 0.000000e+00 : f32
    %226 = vector.broadcast %cst_81 : f32 to vector<8x8xf32>
    %227 = arith.subf %226, %225 : vector<8x8xf32>
    %228 = math.exp %227 : vector<8x8xf32>
    %cst_82 = arith.constant 1.000000e+00 : f32
    %229 = vector.broadcast %cst_82 : f32 to vector<8x8xf32>
    %230 = arith.addf %229, %228 : vector<8x8xf32>
    %cst_83 = arith.constant 1.000000e+00 : f32
    %231 = vector.broadcast %cst_83 : f32 to vector<8x8xf32>
    %232 = arith.divf %231, %230 : vector<8x8xf32>
    %cst_84 = arith.constant 0.000000e+00 : f32
    %233 = vector.broadcast %cst_84 : f32 to vector<8x8xf32>
    %234 = arith.subf %233, %225 : vector<8x8xf32>
    %cst_85 = arith.constant -27.6310215 : f32
    %235 = vector.broadcast %cst_85 : f32 to vector<8x8xf32>
    %236 = arith.maximumf %234, %235 : vector<8x8xf32>
    %cst_86 = arith.constant 2.000000e-01 : f32
    %237 = vector.broadcast %cst_86 : f32 to vector<8x8xf32>
    %238 = arith.mulf %236, %237 : vector<8x8xf32>
    %239 = arith.subf %220, %223 : vector<8x8xf32>
    %240 = arith.addf %239, %238 : vector<8x8xf32>
    %cst_87 = arith.constant 5.000000e+00 : f32
    %241 = vector.broadcast %cst_87 : f32 to vector<8x8xf32>
    %242 = arith.mulf %241, %240 : vector<8x8xf32>
    %243 = math.exp %242 : vector<8x8xf32>
    %cst_88 = arith.constant 1.000000e+00 : f32
    %244 = vector.broadcast %cst_88 : f32 to vector<8x8xf32>
    %245 = arith.addf %244, %243 : vector<8x8xf32>
    %cst_89 = arith.constant 9.99999996E-13 : f32
    %246 = vector.broadcast %cst_89 : f32 to vector<8x8xf32>
    %247 = arith.maximumf %245, %246 : vector<8x8xf32>
    %248 = math.log %247 : vector<8x8xf32>
    %249 = arith.mulf %232, %248 : vector<8x8xf32>
    %cst_90 = arith.constant 1.000000e+00 : f32
    %250 = vector.broadcast %cst_90 : f32 to vector<8x8xf32>
    %251 = arith.subf %250, %232 : vector<8x8xf32>
    %cst_91 = arith.constant 0.000000e+00 : f32
    %252 = vector.broadcast %cst_91 : f32 to vector<8x8xf32>
    %253 = arith.subf %252, %242 : vector<8x8xf32>
    %254 = math.exp %253 : vector<8x8xf32>
    %cst_92 = arith.constant 1.000000e+00 : f32
    %255 = vector.broadcast %cst_92 : f32 to vector<8x8xf32>
    %256 = arith.addf %255, %254 : vector<8x8xf32>
    %cst_93 = arith.constant 9.99999996E-13 : f32
    %257 = vector.broadcast %cst_93 : f32 to vector<8x8xf32>
    %258 = arith.maximumf %256, %257 : vector<8x8xf32>
    %259 = math.log %258 : vector<8x8xf32>
    %260 = arith.mulf %251, %259 : vector<8x8xf32>
    %261 = arith.addf %249, %260 : vector<8x8xf32>
    %cst_94 = arith.constant dense<0.000000e+00> : vector<8xf32>
    %262 = vector.multi_reduction <add>, %261, %cst_94 [1] : vector<8x8xf32> to vector<8xf32>
    %263 = vector.shape_cast %262 : vector<8xf32> to vector<8x1xf32>
    %cst_95 = arith.constant dense<0.000000e+00> : vector<1xf32>
    %264 = vector.multi_reduction <add>, %263, %cst_95 [0] : vector<8x1xf32> to vector<1xf32>
    %265 = vector.shape_cast %264 : vector<1xf32> to vector<1x1xf32>
    %266 = arith.addf %197, %265 : vector<1x1xf32>
    %c3_i32 = arith.constant 3 : i32
    %267 = vector.broadcast %c3_i32 : i32 to vector<8x8xi32>
    %268 = arith.cmpi eq, %0, %267 : vector<8x8xi32>
    %269 = vector.broadcast %c3_i32 : i32 to vector<8x8xi32>
    %270 = arith.cmpi eq, %1, %269 : vector<8x8xi32>
    %cst_96 = arith.constant 0.000000e+00 : f32
    %271 = vector.broadcast %cst_96 : f32 to vector<8x8xf32>
    %272 = arith.select %268, %33, %271 : vector<8x8xi1>, vector<8x8xf32>
    %cst_97 = arith.constant dense<0.000000e+00> : vector<8xf32>
    %273 = vector.multi_reduction <add>, %272, %cst_97 [0] : vector<8x8xf32> to vector<8xf32>
    %274 = vector.shape_cast %273 : vector<8xf32> to vector<1x8xf32>
    %cst_98 = arith.constant 0.000000e+00 : f32
    %275 = vector.broadcast %cst_98 : f32 to vector<8x8xf32>
    %276 = arith.select %270, %33, %275 : vector<8x8xi1>, vector<8x8xf32>
    %cst_99 = arith.constant dense<0.000000e+00> : vector<8xf32>
    %277 = vector.multi_reduction <add>, %276, %cst_99 [1] : vector<8x8xf32> to vector<8xf32>
    %278 = vector.shape_cast %277 : vector<8xf32> to vector<8x1xf32>
    %cst_100 = arith.constant 0.000000e+00 : f32
    %279 = vector.broadcast %cst_100 : f32 to vector<8x8xf32>
    %280 = arith.select %268, %58, %279 : vector<8x8xi1>, vector<8x8xf32>
    %cst_101 = arith.constant dense<0.000000e+00> : vector<8xf32>
    %281 = vector.multi_reduction <add>, %280, %cst_101 [0] : vector<8x8xf32> to vector<8xf32>
    %282 = vector.shape_cast %281 : vector<8xf32> to vector<1x8xf32>
    %cst_102 = arith.constant 0.000000e+00 : f32
    %283 = vector.broadcast %cst_102 : f32 to vector<8x8xf32>
    %284 = arith.select %270, %58, %283 : vector<8x8xi1>, vector<8x8xf32>
    %cst_103 = arith.constant dense<0.000000e+00> : vector<8xf32>
    %285 = vector.multi_reduction <add>, %284, %cst_103 [1] : vector<8x8xf32> to vector<8xf32>
    %286 = vector.shape_cast %285 : vector<8xf32> to vector<8x1xf32>
    %287 = vector.broadcast %274 : vector<1x8xf32> to vector<8x8xf32>
    %288 = vector.broadcast %278 : vector<8x1xf32> to vector<8x8xf32>
    %289 = arith.subf %287, %288 : vector<8x8xf32>
    %290 = vector.broadcast %282 : vector<1x8xf32> to vector<8x8xf32>
    %291 = vector.broadcast %286 : vector<8x1xf32> to vector<8x8xf32>
    %292 = arith.subf %290, %291 : vector<8x8xf32>
    %cst_104 = arith.constant 2.000000e+00 : f32
    %293 = vector.broadcast %cst_104 : f32 to vector<8x8xf32>
    %294 = arith.mulf %289, %293 : vector<8x8xf32>
    %cst_105 = arith.constant 0.000000e+00 : f32
    %295 = vector.broadcast %cst_105 : f32 to vector<8x8xf32>
    %296 = arith.subf %295, %294 : vector<8x8xf32>
    %297 = math.exp %296 : vector<8x8xf32>
    %cst_106 = arith.constant 1.000000e+00 : f32
    %298 = vector.broadcast %cst_106 : f32 to vector<8x8xf32>
    %299 = arith.addf %298, %297 : vector<8x8xf32>
    %cst_107 = arith.constant 1.000000e+00 : f32
    %300 = vector.broadcast %cst_107 : f32 to vector<8x8xf32>
    %301 = arith.divf %300, %299 : vector<8x8xf32>
    %cst_108 = arith.constant 0.000000e+00 : f32
    %302 = vector.broadcast %cst_108 : f32 to vector<8x8xf32>
    %303 = arith.subf %302, %294 : vector<8x8xf32>
    %cst_109 = arith.constant -27.6310215 : f32
    %304 = vector.broadcast %cst_109 : f32 to vector<8x8xf32>
    %305 = arith.maximumf %303, %304 : vector<8x8xf32>
    %cst_110 = arith.constant 2.000000e-01 : f32
    %306 = vector.broadcast %cst_110 : f32 to vector<8x8xf32>
    %307 = arith.mulf %305, %306 : vector<8x8xf32>
    %308 = arith.subf %289, %292 : vector<8x8xf32>
    %309 = arith.addf %308, %307 : vector<8x8xf32>
    %cst_111 = arith.constant 5.000000e+00 : f32
    %310 = vector.broadcast %cst_111 : f32 to vector<8x8xf32>
    %311 = arith.mulf %310, %309 : vector<8x8xf32>
    %312 = math.exp %311 : vector<8x8xf32>
    %cst_112 = arith.constant 1.000000e+00 : f32
    %313 = vector.broadcast %cst_112 : f32 to vector<8x8xf32>
    %314 = arith.addf %313, %312 : vector<8x8xf32>
    %cst_113 = arith.constant 9.99999996E-13 : f32
    %315 = vector.broadcast %cst_113 : f32 to vector<8x8xf32>
    %316 = arith.maximumf %314, %315 : vector<8x8xf32>
    %317 = math.log %316 : vector<8x8xf32>
    %318 = arith.mulf %301, %317 : vector<8x8xf32>
    %cst_114 = arith.constant 1.000000e+00 : f32
    %319 = vector.broadcast %cst_114 : f32 to vector<8x8xf32>
    %320 = arith.subf %319, %301 : vector<8x8xf32>
    %cst_115 = arith.constant 0.000000e+00 : f32
    %321 = vector.broadcast %cst_115 : f32 to vector<8x8xf32>
    %322 = arith.subf %321, %311 : vector<8x8xf32>
    %323 = math.exp %322 : vector<8x8xf32>
    %cst_116 = arith.constant 1.000000e+00 : f32
    %324 = vector.broadcast %cst_116 : f32 to vector<8x8xf32>
    %325 = arith.addf %324, %323 : vector<8x8xf32>
    %cst_117 = arith.constant 9.99999996E-13 : f32
    %326 = vector.broadcast %cst_117 : f32 to vector<8x8xf32>
    %327 = arith.maximumf %325, %326 : vector<8x8xf32>
    %328 = math.log %327 : vector<8x8xf32>
    %329 = arith.mulf %320, %328 : vector<8x8xf32>
    %330 = arith.addf %318, %329 : vector<8x8xf32>
    %cst_118 = arith.constant dense<0.000000e+00> : vector<8xf32>
    %331 = vector.multi_reduction <add>, %330, %cst_118 [1] : vector<8x8xf32> to vector<8xf32>
    %332 = vector.shape_cast %331 : vector<8xf32> to vector<8x1xf32>
    %cst_119 = arith.constant dense<0.000000e+00> : vector<1xf32>
    %333 = vector.multi_reduction <add>, %332, %cst_119 [0] : vector<8x1xf32> to vector<1xf32>
    %334 = vector.shape_cast %333 : vector<1xf32> to vector<1x1xf32>
    %335 = arith.addf %266, %334 : vector<1x1xf32>
    %c4_i32 = arith.constant 4 : i32
    %336 = vector.broadcast %c4_i32 : i32 to vector<8x8xi32>
    %337 = arith.cmpi eq, %0, %336 : vector<8x8xi32>
    %338 = vector.broadcast %c4_i32 : i32 to vector<8x8xi32>
    %339 = arith.cmpi eq, %1, %338 : vector<8x8xi32>
    %cst_120 = arith.constant 0.000000e+00 : f32
    %340 = vector.broadcast %cst_120 : f32 to vector<8x8xf32>
    %341 = arith.select %337, %33, %340 : vector<8x8xi1>, vector<8x8xf32>
    %cst_121 = arith.constant dense<0.000000e+00> : vector<8xf32>
    %342 = vector.multi_reduction <add>, %341, %cst_121 [0] : vector<8x8xf32> to vector<8xf32>
    %343 = vector.shape_cast %342 : vector<8xf32> to vector<1x8xf32>
    %cst_122 = arith.constant 0.000000e+00 : f32
    %344 = vector.broadcast %cst_122 : f32 to vector<8x8xf32>
    %345 = arith.select %339, %33, %344 : vector<8x8xi1>, vector<8x8xf32>
    %cst_123 = arith.constant dense<0.000000e+00> : vector<8xf32>
    %346 = vector.multi_reduction <add>, %345, %cst_123 [1] : vector<8x8xf32> to vector<8xf32>
    %347 = vector.shape_cast %346 : vector<8xf32> to vector<8x1xf32>
    %cst_124 = arith.constant 0.000000e+00 : f32
    %348 = vector.broadcast %cst_124 : f32 to vector<8x8xf32>
    %349 = arith.select %337, %58, %348 : vector<8x8xi1>, vector<8x8xf32>
    %cst_125 = arith.constant dense<0.000000e+00> : vector<8xf32>
    %350 = vector.multi_reduction <add>, %349, %cst_125 [0] : vector<8x8xf32> to vector<8xf32>
    %351 = vector.shape_cast %350 : vector<8xf32> to vector<1x8xf32>
    %cst_126 = arith.constant 0.000000e+00 : f32
    %352 = vector.broadcast %cst_126 : f32 to vector<8x8xf32>
    %353 = arith.select %339, %58, %352 : vector<8x8xi1>, vector<8x8xf32>
    %cst_127 = arith.constant dense<0.000000e+00> : vector<8xf32>
    %354 = vector.multi_reduction <add>, %353, %cst_127 [1] : vector<8x8xf32> to vector<8xf32>
    %355 = vector.shape_cast %354 : vector<8xf32> to vector<8x1xf32>
    %356 = vector.broadcast %343 : vector<1x8xf32> to vector<8x8xf32>
    %357 = vector.broadcast %347 : vector<8x1xf32> to vector<8x8xf32>
    %358 = arith.subf %356, %357 : vector<8x8xf32>
    %359 = vector.broadcast %351 : vector<1x8xf32> to vector<8x8xf32>
    %360 = vector.broadcast %355 : vector<8x1xf32> to vector<8x8xf32>
    %361 = arith.subf %359, %360 : vector<8x8xf32>
    %cst_128 = arith.constant 2.000000e+00 : f32
    %362 = vector.broadcast %cst_128 : f32 to vector<8x8xf32>
    %363 = arith.mulf %358, %362 : vector<8x8xf32>
    %cst_129 = arith.constant 0.000000e+00 : f32
    %364 = vector.broadcast %cst_129 : f32 to vector<8x8xf32>
    %365 = arith.subf %364, %363 : vector<8x8xf32>
    %366 = math.exp %365 : vector<8x8xf32>
    %cst_130 = arith.constant 1.000000e+00 : f32
    %367 = vector.broadcast %cst_130 : f32 to vector<8x8xf32>
    %368 = arith.addf %367, %366 : vector<8x8xf32>
    %cst_131 = arith.constant 1.000000e+00 : f32
    %369 = vector.broadcast %cst_131 : f32 to vector<8x8xf32>
    %370 = arith.divf %369, %368 : vector<8x8xf32>
    %cst_132 = arith.constant 0.000000e+00 : f32
    %371 = vector.broadcast %cst_132 : f32 to vector<8x8xf32>
    %372 = arith.subf %371, %363 : vector<8x8xf32>
    %cst_133 = arith.constant -27.6310215 : f32
    %373 = vector.broadcast %cst_133 : f32 to vector<8x8xf32>
    %374 = arith.maximumf %372, %373 : vector<8x8xf32>
    %cst_134 = arith.constant 2.000000e-01 : f32
    %375 = vector.broadcast %cst_134 : f32 to vector<8x8xf32>
    %376 = arith.mulf %374, %375 : vector<8x8xf32>
    %377 = arith.subf %358, %361 : vector<8x8xf32>
    %378 = arith.addf %377, %376 : vector<8x8xf32>
    %cst_135 = arith.constant 5.000000e+00 : f32
    %379 = vector.broadcast %cst_135 : f32 to vector<8x8xf32>
    %380 = arith.mulf %379, %378 : vector<8x8xf32>
    %381 = math.exp %380 : vector<8x8xf32>
    %cst_136 = arith.constant 1.000000e+00 : f32
    %382 = vector.broadcast %cst_136 : f32 to vector<8x8xf32>
    %383 = arith.addf %382, %381 : vector<8x8xf32>
    %cst_137 = arith.constant 9.99999996E-13 : f32
    %384 = vector.broadcast %cst_137 : f32 to vector<8x8xf32>
    %385 = arith.maximumf %383, %384 : vector<8x8xf32>
    %386 = math.log %385 : vector<8x8xf32>
    %387 = arith.mulf %370, %386 : vector<8x8xf32>
    %cst_138 = arith.constant 1.000000e+00 : f32
    %388 = vector.broadcast %cst_138 : f32 to vector<8x8xf32>
    %389 = arith.subf %388, %370 : vector<8x8xf32>
    %cst_139 = arith.constant 0.000000e+00 : f32
    %390 = vector.broadcast %cst_139 : f32 to vector<8x8xf32>
    %391 = arith.subf %390, %380 : vector<8x8xf32>
    %392 = math.exp %391 : vector<8x8xf32>
    %cst_140 = arith.constant 1.000000e+00 : f32
    %393 = vector.broadcast %cst_140 : f32 to vector<8x8xf32>
    %394 = arith.addf %393, %392 : vector<8x8xf32>
    %cst_141 = arith.constant 9.99999996E-13 : f32
    %395 = vector.broadcast %cst_141 : f32 to vector<8x8xf32>
    %396 = arith.maximumf %394, %395 : vector<8x8xf32>
    %397 = math.log %396 : vector<8x8xf32>
    %398 = arith.mulf %389, %397 : vector<8x8xf32>
    %399 = arith.addf %387, %398 : vector<8x8xf32>
    %cst_142 = arith.constant dense<0.000000e+00> : vector<8xf32>
    %400 = vector.multi_reduction <add>, %399, %cst_142 [1] : vector<8x8xf32> to vector<8xf32>
    %401 = vector.shape_cast %400 : vector<8xf32> to vector<8x1xf32>
    %cst_143 = arith.constant dense<0.000000e+00> : vector<1xf32>
    %402 = vector.multi_reduction <add>, %401, %cst_143 [0] : vector<8x1xf32> to vector<1xf32>
    %403 = vector.shape_cast %402 : vector<1xf32> to vector<1x1xf32>
    %404 = arith.addf %335, %403 : vector<1x1xf32>
    %c5_i32 = arith.constant 5 : i32
    %405 = vector.broadcast %c5_i32 : i32 to vector<8x8xi32>
    %406 = arith.cmpi eq, %0, %405 : vector<8x8xi32>
    %407 = vector.broadcast %c5_i32 : i32 to vector<8x8xi32>
    %408 = arith.cmpi eq, %1, %407 : vector<8x8xi32>
    %cst_144 = arith.constant 0.000000e+00 : f32
    %409 = vector.broadcast %cst_144 : f32 to vector<8x8xf32>
    %410 = arith.select %406, %33, %409 : vector<8x8xi1>, vector<8x8xf32>
    %cst_145 = arith.constant dense<0.000000e+00> : vector<8xf32>
    %411 = vector.multi_reduction <add>, %410, %cst_145 [0] : vector<8x8xf32> to vector<8xf32>
    %412 = vector.shape_cast %411 : vector<8xf32> to vector<1x8xf32>
    %cst_146 = arith.constant 0.000000e+00 : f32
    %413 = vector.broadcast %cst_146 : f32 to vector<8x8xf32>
    %414 = arith.select %408, %33, %413 : vector<8x8xi1>, vector<8x8xf32>
    %cst_147 = arith.constant dense<0.000000e+00> : vector<8xf32>
    %415 = vector.multi_reduction <add>, %414, %cst_147 [1] : vector<8x8xf32> to vector<8xf32>
    %416 = vector.shape_cast %415 : vector<8xf32> to vector<8x1xf32>
    %cst_148 = arith.constant 0.000000e+00 : f32
    %417 = vector.broadcast %cst_148 : f32 to vector<8x8xf32>
    %418 = arith.select %406, %58, %417 : vector<8x8xi1>, vector<8x8xf32>
    %cst_149 = arith.constant dense<0.000000e+00> : vector<8xf32>
    %419 = vector.multi_reduction <add>, %418, %cst_149 [0] : vector<8x8xf32> to vector<8xf32>
    %420 = vector.shape_cast %419 : vector<8xf32> to vector<1x8xf32>
    %cst_150 = arith.constant 0.000000e+00 : f32
    %421 = vector.broadcast %cst_150 : f32 to vector<8x8xf32>
    %422 = arith.select %408, %58, %421 : vector<8x8xi1>, vector<8x8xf32>
    %cst_151 = arith.constant dense<0.000000e+00> : vector<8xf32>
    %423 = vector.multi_reduction <add>, %422, %cst_151 [1] : vector<8x8xf32> to vector<8xf32>
    %424 = vector.shape_cast %423 : vector<8xf32> to vector<8x1xf32>
    %425 = vector.broadcast %412 : vector<1x8xf32> to vector<8x8xf32>
    %426 = vector.broadcast %416 : vector<8x1xf32> to vector<8x8xf32>
    %427 = arith.subf %425, %426 : vector<8x8xf32>
    %428 = vector.broadcast %420 : vector<1x8xf32> to vector<8x8xf32>
    %429 = vector.broadcast %424 : vector<8x1xf32> to vector<8x8xf32>
    %430 = arith.subf %428, %429 : vector<8x8xf32>
    %cst_152 = arith.constant 2.000000e+00 : f32
    %431 = vector.broadcast %cst_152 : f32 to vector<8x8xf32>
    %432 = arith.mulf %427, %431 : vector<8x8xf32>
    %cst_153 = arith.constant 0.000000e+00 : f32
    %433 = vector.broadcast %cst_153 : f32 to vector<8x8xf32>
    %434 = arith.subf %433, %432 : vector<8x8xf32>
    %435 = math.exp %434 : vector<8x8xf32>
    %cst_154 = arith.constant 1.000000e+00 : f32
    %436 = vector.broadcast %cst_154 : f32 to vector<8x8xf32>
    %437 = arith.addf %436, %435 : vector<8x8xf32>
    %cst_155 = arith.constant 1.000000e+00 : f32
    %438 = vector.broadcast %cst_155 : f32 to vector<8x8xf32>
    %439 = arith.divf %438, %437 : vector<8x8xf32>
    %cst_156 = arith.constant 0.000000e+00 : f32
    %440 = vector.broadcast %cst_156 : f32 to vector<8x8xf32>
    %441 = arith.subf %440, %432 : vector<8x8xf32>
    %cst_157 = arith.constant -27.6310215 : f32
    %442 = vector.broadcast %cst_157 : f32 to vector<8x8xf32>
    %443 = arith.maximumf %441, %442 : vector<8x8xf32>
    %cst_158 = arith.constant 2.000000e-01 : f32
    %444 = vector.broadcast %cst_158 : f32 to vector<8x8xf32>
    %445 = arith.mulf %443, %444 : vector<8x8xf32>
    %446 = arith.subf %427, %430 : vector<8x8xf32>
    %447 = arith.addf %446, %445 : vector<8x8xf32>
    %cst_159 = arith.constant 5.000000e+00 : f32
    %448 = vector.broadcast %cst_159 : f32 to vector<8x8xf32>
    %449 = arith.mulf %448, %447 : vector<8x8xf32>
    %450 = math.exp %449 : vector<8x8xf32>
    %cst_160 = arith.constant 1.000000e+00 : f32
    %451 = vector.broadcast %cst_160 : f32 to vector<8x8xf32>
    %452 = arith.addf %451, %450 : vector<8x8xf32>
    %cst_161 = arith.constant 9.99999996E-13 : f32
    %453 = vector.broadcast %cst_161 : f32 to vector<8x8xf32>
    %454 = arith.maximumf %452, %453 : vector<8x8xf32>
    %455 = math.log %454 : vector<8x8xf32>
    %456 = arith.mulf %439, %455 : vector<8x8xf32>
    %cst_162 = arith.constant 1.000000e+00 : f32
    %457 = vector.broadcast %cst_162 : f32 to vector<8x8xf32>
    %458 = arith.subf %457, %439 : vector<8x8xf32>
    %cst_163 = arith.constant 0.000000e+00 : f32
    %459 = vector.broadcast %cst_163 : f32 to vector<8x8xf32>
    %460 = arith.subf %459, %449 : vector<8x8xf32>
    %461 = math.exp %460 : vector<8x8xf32>
    %cst_164 = arith.constant 1.000000e+00 : f32
    %462 = vector.broadcast %cst_164 : f32 to vector<8x8xf32>
    %463 = arith.addf %462, %461 : vector<8x8xf32>
    %cst_165 = arith.constant 9.99999996E-13 : f32
    %464 = vector.broadcast %cst_165 : f32 to vector<8x8xf32>
    %465 = arith.maximumf %463, %464 : vector<8x8xf32>
    %466 = math.log %465 : vector<8x8xf32>
    %467 = arith.mulf %458, %466 : vector<8x8xf32>
    %468 = arith.addf %456, %467 : vector<8x8xf32>
    %cst_166 = arith.constant dense<0.000000e+00> : vector<8xf32>
    %469 = vector.multi_reduction <add>, %468, %cst_166 [1] : vector<8x8xf32> to vector<8xf32>
    %470 = vector.shape_cast %469 : vector<8xf32> to vector<8x1xf32>
    %cst_167 = arith.constant dense<0.000000e+00> : vector<1xf32>
    %471 = vector.multi_reduction <add>, %470, %cst_167 [0] : vector<8x1xf32> to vector<1xf32>
    %472 = vector.shape_cast %471 : vector<1xf32> to vector<1x1xf32>
    %473 = arith.addf %404, %472 : vector<1x1xf32>
    %c6_i32 = arith.constant 6 : i32
    %474 = vector.broadcast %c6_i32 : i32 to vector<8x8xi32>
    %475 = arith.cmpi eq, %0, %474 : vector<8x8xi32>
    %476 = vector.broadcast %c6_i32 : i32 to vector<8x8xi32>
    %477 = arith.cmpi eq, %1, %476 : vector<8x8xi32>
    %cst_168 = arith.constant 0.000000e+00 : f32
    %478 = vector.broadcast %cst_168 : f32 to vector<8x8xf32>
    %479 = arith.select %475, %33, %478 : vector<8x8xi1>, vector<8x8xf32>
    %cst_169 = arith.constant dense<0.000000e+00> : vector<8xf32>
    %480 = vector.multi_reduction <add>, %479, %cst_169 [0] : vector<8x8xf32> to vector<8xf32>
    %481 = vector.shape_cast %480 : vector<8xf32> to vector<1x8xf32>
    %cst_170 = arith.constant 0.000000e+00 : f32
    %482 = vector.broadcast %cst_170 : f32 to vector<8x8xf32>
    %483 = arith.select %477, %33, %482 : vector<8x8xi1>, vector<8x8xf32>
    %cst_171 = arith.constant dense<0.000000e+00> : vector<8xf32>
    %484 = vector.multi_reduction <add>, %483, %cst_171 [1] : vector<8x8xf32> to vector<8xf32>
    %485 = vector.shape_cast %484 : vector<8xf32> to vector<8x1xf32>
    %cst_172 = arith.constant 0.000000e+00 : f32
    %486 = vector.broadcast %cst_172 : f32 to vector<8x8xf32>
    %487 = arith.select %475, %58, %486 : vector<8x8xi1>, vector<8x8xf32>
    %cst_173 = arith.constant dense<0.000000e+00> : vector<8xf32>
    %488 = vector.multi_reduction <add>, %487, %cst_173 [0] : vector<8x8xf32> to vector<8xf32>
    %489 = vector.shape_cast %488 : vector<8xf32> to vector<1x8xf32>
    %cst_174 = arith.constant 0.000000e+00 : f32
    %490 = vector.broadcast %cst_174 : f32 to vector<8x8xf32>
    %491 = arith.select %477, %58, %490 : vector<8x8xi1>, vector<8x8xf32>
    %cst_175 = arith.constant dense<0.000000e+00> : vector<8xf32>
    %492 = vector.multi_reduction <add>, %491, %cst_175 [1] : vector<8x8xf32> to vector<8xf32>
    %493 = vector.shape_cast %492 : vector<8xf32> to vector<8x1xf32>
    %494 = vector.broadcast %481 : vector<1x8xf32> to vector<8x8xf32>
    %495 = vector.broadcast %485 : vector<8x1xf32> to vector<8x8xf32>
    %496 = arith.subf %494, %495 : vector<8x8xf32>
    %497 = vector.broadcast %489 : vector<1x8xf32> to vector<8x8xf32>
    %498 = vector.broadcast %493 : vector<8x1xf32> to vector<8x8xf32>
    %499 = arith.subf %497, %498 : vector<8x8xf32>
    %cst_176 = arith.constant 2.000000e+00 : f32
    %500 = vector.broadcast %cst_176 : f32 to vector<8x8xf32>
    %501 = arith.mulf %496, %500 : vector<8x8xf32>
    %cst_177 = arith.constant 0.000000e+00 : f32
    %502 = vector.broadcast %cst_177 : f32 to vector<8x8xf32>
    %503 = arith.subf %502, %501 : vector<8x8xf32>
    %504 = math.exp %503 : vector<8x8xf32>
    %cst_178 = arith.constant 1.000000e+00 : f32
    %505 = vector.broadcast %cst_178 : f32 to vector<8x8xf32>
    %506 = arith.addf %505, %504 : vector<8x8xf32>
    %cst_179 = arith.constant 1.000000e+00 : f32
    %507 = vector.broadcast %cst_179 : f32 to vector<8x8xf32>
    %508 = arith.divf %507, %506 : vector<8x8xf32>
    %cst_180 = arith.constant 0.000000e+00 : f32
    %509 = vector.broadcast %cst_180 : f32 to vector<8x8xf32>
    %510 = arith.subf %509, %501 : vector<8x8xf32>
    %cst_181 = arith.constant -27.6310215 : f32
    %511 = vector.broadcast %cst_181 : f32 to vector<8x8xf32>
    %512 = arith.maximumf %510, %511 : vector<8x8xf32>
    %cst_182 = arith.constant 2.000000e-01 : f32
    %513 = vector.broadcast %cst_182 : f32 to vector<8x8xf32>
    %514 = arith.mulf %512, %513 : vector<8x8xf32>
    %515 = arith.subf %496, %499 : vector<8x8xf32>
    %516 = arith.addf %515, %514 : vector<8x8xf32>
    %cst_183 = arith.constant 5.000000e+00 : f32
    %517 = vector.broadcast %cst_183 : f32 to vector<8x8xf32>
    %518 = arith.mulf %517, %516 : vector<8x8xf32>
    %519 = math.exp %518 : vector<8x8xf32>
    %cst_184 = arith.constant 1.000000e+00 : f32
    %520 = vector.broadcast %cst_184 : f32 to vector<8x8xf32>
    %521 = arith.addf %520, %519 : vector<8x8xf32>
    %cst_185 = arith.constant 9.99999996E-13 : f32
    %522 = vector.broadcast %cst_185 : f32 to vector<8x8xf32>
    %523 = arith.maximumf %521, %522 : vector<8x8xf32>
    %524 = math.log %523 : vector<8x8xf32>
    %525 = arith.mulf %508, %524 : vector<8x8xf32>
    %cst_186 = arith.constant 1.000000e+00 : f32
    %526 = vector.broadcast %cst_186 : f32 to vector<8x8xf32>
    %527 = arith.subf %526, %508 : vector<8x8xf32>
    %cst_187 = arith.constant 0.000000e+00 : f32
    %528 = vector.broadcast %cst_187 : f32 to vector<8x8xf32>
    %529 = arith.subf %528, %518 : vector<8x8xf32>
    %530 = math.exp %529 : vector<8x8xf32>
    %cst_188 = arith.constant 1.000000e+00 : f32
    %531 = vector.broadcast %cst_188 : f32 to vector<8x8xf32>
    %532 = arith.addf %531, %530 : vector<8x8xf32>
    %cst_189 = arith.constant 9.99999996E-13 : f32
    %533 = vector.broadcast %cst_189 : f32 to vector<8x8xf32>
    %534 = arith.maximumf %532, %533 : vector<8x8xf32>
    %535 = math.log %534 : vector<8x8xf32>
    %536 = arith.mulf %527, %535 : vector<8x8xf32>
    %537 = arith.addf %525, %536 : vector<8x8xf32>
    %cst_190 = arith.constant dense<0.000000e+00> : vector<8xf32>
    %538 = vector.multi_reduction <add>, %537, %cst_190 [1] : vector<8x8xf32> to vector<8xf32>
    %539 = vector.shape_cast %538 : vector<8xf32> to vector<8x1xf32>
    %cst_191 = arith.constant dense<0.000000e+00> : vector<1xf32>
    %540 = vector.multi_reduction <add>, %539, %cst_191 [0] : vector<8x1xf32> to vector<1xf32>
    %541 = vector.shape_cast %540 : vector<1xf32> to vector<1x1xf32>
    %542 = arith.addf %473, %541 : vector<1x1xf32>
    %c7_i32 = arith.constant 7 : i32
    %543 = vector.broadcast %c7_i32 : i32 to vector<8x8xi32>
    %544 = arith.cmpi eq, %0, %543 : vector<8x8xi32>
    %545 = vector.broadcast %c7_i32 : i32 to vector<8x8xi32>
    %546 = arith.cmpi eq, %1, %545 : vector<8x8xi32>
    %cst_192 = arith.constant 0.000000e+00 : f32
    %547 = vector.broadcast %cst_192 : f32 to vector<8x8xf32>
    %548 = arith.select %544, %33, %547 : vector<8x8xi1>, vector<8x8xf32>
    %cst_193 = arith.constant dense<0.000000e+00> : vector<8xf32>
    %549 = vector.multi_reduction <add>, %548, %cst_193 [0] : vector<8x8xf32> to vector<8xf32>
    %550 = vector.shape_cast %549 : vector<8xf32> to vector<1x8xf32>
    %cst_194 = arith.constant 0.000000e+00 : f32
    %551 = vector.broadcast %cst_194 : f32 to vector<8x8xf32>
    %552 = arith.select %546, %33, %551 : vector<8x8xi1>, vector<8x8xf32>
    %cst_195 = arith.constant dense<0.000000e+00> : vector<8xf32>
    %553 = vector.multi_reduction <add>, %552, %cst_195 [1] : vector<8x8xf32> to vector<8xf32>
    %554 = vector.shape_cast %553 : vector<8xf32> to vector<8x1xf32>
    %cst_196 = arith.constant 0.000000e+00 : f32
    %555 = vector.broadcast %cst_196 : f32 to vector<8x8xf32>
    %556 = arith.select %544, %58, %555 : vector<8x8xi1>, vector<8x8xf32>
    %cst_197 = arith.constant dense<0.000000e+00> : vector<8xf32>
    %557 = vector.multi_reduction <add>, %556, %cst_197 [0] : vector<8x8xf32> to vector<8xf32>
    %558 = vector.shape_cast %557 : vector<8xf32> to vector<1x8xf32>
    %cst_198 = arith.constant 0.000000e+00 : f32
    %559 = vector.broadcast %cst_198 : f32 to vector<8x8xf32>
    %560 = arith.select %546, %58, %559 : vector<8x8xi1>, vector<8x8xf32>
    %cst_199 = arith.constant dense<0.000000e+00> : vector<8xf32>
    %561 = vector.multi_reduction <add>, %560, %cst_199 [1] : vector<8x8xf32> to vector<8xf32>
    %562 = vector.shape_cast %561 : vector<8xf32> to vector<8x1xf32>
    %563 = vector.broadcast %550 : vector<1x8xf32> to vector<8x8xf32>
    %564 = vector.broadcast %554 : vector<8x1xf32> to vector<8x8xf32>
    %565 = arith.subf %563, %564 : vector<8x8xf32>
    %566 = vector.broadcast %558 : vector<1x8xf32> to vector<8x8xf32>
    %567 = vector.broadcast %562 : vector<8x1xf32> to vector<8x8xf32>
    %568 = arith.subf %566, %567 : vector<8x8xf32>
    %cst_200 = arith.constant 2.000000e+00 : f32
    %569 = vector.broadcast %cst_200 : f32 to vector<8x8xf32>
    %570 = arith.mulf %565, %569 : vector<8x8xf32>
    %cst_201 = arith.constant 0.000000e+00 : f32
    %571 = vector.broadcast %cst_201 : f32 to vector<8x8xf32>
    %572 = arith.subf %571, %570 : vector<8x8xf32>
    %573 = math.exp %572 : vector<8x8xf32>
    %cst_202 = arith.constant 1.000000e+00 : f32
    %574 = vector.broadcast %cst_202 : f32 to vector<8x8xf32>
    %575 = arith.addf %574, %573 : vector<8x8xf32>
    %cst_203 = arith.constant 1.000000e+00 : f32
    %576 = vector.broadcast %cst_203 : f32 to vector<8x8xf32>
    %577 = arith.divf %576, %575 : vector<8x8xf32>
    %cst_204 = arith.constant 0.000000e+00 : f32
    %578 = vector.broadcast %cst_204 : f32 to vector<8x8xf32>
    %579 = arith.subf %578, %570 : vector<8x8xf32>
    %cst_205 = arith.constant -27.6310215 : f32
    %580 = vector.broadcast %cst_205 : f32 to vector<8x8xf32>
    %581 = arith.maximumf %579, %580 : vector<8x8xf32>
    %cst_206 = arith.constant 2.000000e-01 : f32
    %582 = vector.broadcast %cst_206 : f32 to vector<8x8xf32>
    %583 = arith.mulf %581, %582 : vector<8x8xf32>
    %584 = arith.subf %565, %568 : vector<8x8xf32>
    %585 = arith.addf %584, %583 : vector<8x8xf32>
    %cst_207 = arith.constant 5.000000e+00 : f32
    %586 = vector.broadcast %cst_207 : f32 to vector<8x8xf32>
    %587 = arith.mulf %586, %585 : vector<8x8xf32>
    %588 = math.exp %587 : vector<8x8xf32>
    %cst_208 = arith.constant 1.000000e+00 : f32
    %589 = vector.broadcast %cst_208 : f32 to vector<8x8xf32>
    %590 = arith.addf %589, %588 : vector<8x8xf32>
    %cst_209 = arith.constant 9.99999996E-13 : f32
    %591 = vector.broadcast %cst_209 : f32 to vector<8x8xf32>
    %592 = arith.maximumf %590, %591 : vector<8x8xf32>
    %593 = math.log %592 : vector<8x8xf32>
    %594 = arith.mulf %577, %593 : vector<8x8xf32>
    %cst_210 = arith.constant 1.000000e+00 : f32
    %595 = vector.broadcast %cst_210 : f32 to vector<8x8xf32>
    %596 = arith.subf %595, %577 : vector<8x8xf32>
    %cst_211 = arith.constant 0.000000e+00 : f32
    %597 = vector.broadcast %cst_211 : f32 to vector<8x8xf32>
    %598 = arith.subf %597, %587 : vector<8x8xf32>
    %599 = math.exp %598 : vector<8x8xf32>
    %cst_212 = arith.constant 1.000000e+00 : f32
    %600 = vector.broadcast %cst_212 : f32 to vector<8x8xf32>
    %601 = arith.addf %600, %599 : vector<8x8xf32>
    %cst_213 = arith.constant 9.99999996E-13 : f32
    %602 = vector.broadcast %cst_213 : f32 to vector<8x8xf32>
    %603 = arith.maximumf %601, %602 : vector<8x8xf32>
    %604 = math.log %603 : vector<8x8xf32>
    %605 = arith.mulf %596, %604 : vector<8x8xf32>
    %606 = arith.addf %594, %605 : vector<8x8xf32>
    %cst_214 = arith.constant dense<0.000000e+00> : vector<8xf32>
    %607 = vector.multi_reduction <add>, %606, %cst_214 [1] : vector<8x8xf32> to vector<8xf32>
    %608 = vector.shape_cast %607 : vector<8xf32> to vector<8x1xf32>
    %cst_215 = arith.constant dense<0.000000e+00> : vector<1xf32>
    %609 = vector.multi_reduction <add>, %608, %cst_215 [0] : vector<8x1xf32> to vector<1xf32>
    %610 = vector.shape_cast %609 : vector<1xf32> to vector<1x1xf32>
    %611 = arith.addf %542, %610 : vector<1x1xf32>
    %c8_i32 = arith.constant 8 : i32
    %cst_216 = arith.constant 3.906250e-04 : f32
    %612 = vector.broadcast %cst_216 : f32 to vector<1x1xf32>
    %613 = arith.mulf %611, %612 : vector<1x1xf32>
    %c0_217 = arith.constant 0 : index
    %c0_218 = arith.constant 0 : index
    %614 = vector.load %arg2[%c0_217, %c0_218] : memref<1x1xf32, #tpu.memory_space<vmem>>, vector<1x1xf32>
    tpu.vector_store %arg2[%c0_217, %c0_218], %613 {strides = array<i32>} : memref<1x1xf32, #tpu.memory_space<vmem>>, vector<1x1xf32>,
    return
  }
}

</mosaic_0001>

<llo_original>
// kernel: tpu_custom_call.1
$region0: #{tpu_custom_call.1}
  #allocation0 [shape = 'u32[]', space=smem, size = 0x4, offset = 0x4, fixed_abs, tag = 'smem constant byte address 0x4 - core index']
  #allocation1 [shape = 'u32[144,128]{1,0:T(1,128)}', space=vmem, size = 0x12000, scoped, tag = 'internal scratch']
  %s0 = inlined_call_operand.hbm [shape: f32[8,64], index: 0, kind: input, shape index: {}]
  %s1 = inlined_call_operand.hbm [shape: f32[8,32], index: 1, kind: input, shape index: {}]
  %s2 = inlined_call_operand.hbm [shape: f32[1,1], index: 2, kind: output, shape index: {}]
  %s3 = sld [smem:[#allocation0]]
  $region26: #{tpu_custom_call.1} parent=0
    _
  %s5 = ssub.s32 1, %s3
  %s6 = scalar_select 0, %s5, %s3
  $region1: #{tpu_custom_call.1} parent=0
    #allocation2 [shape = 'u8[4096]{0}', space=vmem, size = 0x1000, scoped, tag = 'input window, operand 0, single buffered']
    #allocation3 [shape = 's32[1]{0}', space=sflag, size = 0x4, scoped, tag = 'scoped memory for tpu_custom_call.1']
    #allocation4 [shape = 's32[1]{0}', space=sflag, size = 0x4, scoped, tag = 'scoped memory for tpu_custom_call.1']
    #allocation5 [shape = 'u8[4096]{0}', space=vmem, size = 0x1000, scoped, tag = 'input window, operand 1, single buffered']
    #allocation6 [shape = 's32[1]{0}', space=sflag, size = 0x4, scoped, tag = 'scoped memory for tpu_custom_call.1']
    #allocation7 [shape = 'u8[512]{0}', space=vmem, size = 0x400, scoped, tag = 'output window, operand 0, single buffered']
    %7 = vsyncpa [#allocation3], 0
    %8 = vsyncpa [#allocation6], 0
    %9 = vsyncpa [#allocation4], 0
    // Predicated region
    $region2: #{tpu_custom_call.1} parent=1 // pred_check
      _
    $region3: #{tpu_custom_call.1} parent=1 // pred_check_branch
      %11 = sbr.rel (0) target = $region5
    $region4: #{tpu_custom_call.1} parent=1 // pred_region
      %s13 = ssub.s32 128, 128
      %14 = vsyncadd [#allocation3], %s13
      %s16 = sshll.u32 [#allocation2], 4
      %s17 = int_to_ptr.vmem [resolvable:$true] %s16
      %19 = dma.hbm_to_vmem [thread:$0]  %s0, 128, %s17, [#allocation3]
    $region5: #{tpu_custom_call.1} parent=1 // pred_fallthru
      _
    // Predicated region
    $region6: #{tpu_custom_call.1} parent=1 // pred_check
      _
    $region7: #{tpu_custom_call.1} parent=1 // pred_check_branch
      %21 = sbr.rel (0) target = $region9
    $region8: #{tpu_custom_call.1} parent=1 // pred_region
      %s23 = ssub.s32 128, 128
      %24 = vsyncadd [#allocation6], %s23
      %s26 = sshll.u32 [#allocation5], 4
      %s27 = int_to_ptr.vmem [resolvable:$true] %s26
      %29 = dma.hbm_to_vmem [thread:$0]  %s1, 128, %s27, [#allocation6]
    $region9: #{tpu_custom_call.1} parent=1 // pred_fallthru
      _
    // Predicated region
    $region10: #{tpu_custom_call.1} parent=1 // pred_check
      _
    $region11: #{tpu_custom_call.1} parent=1 // pred_check_branch
      %31 = sbr.rel (0) target = $region13
    $region12: #{tpu_custom_call.1} parent=1 // pred_region
      %32 = dma.done [#allocation3], 128
    $region13: #{tpu_custom_call.1} parent=1 // pred_fallthru
      _
    // Predicated region
    $region14: #{tpu_custom_call.1} parent=1 // pred_check
      _
    $region15: #{tpu_custom_call.1} parent=1 // pred_check_branch
      %34 = sbr.rel (0) target = $region17
    $region16: #{tpu_custom_call.1} parent=1 // pred_region
      %35 = dma.done [#allocation6], 128
    $region17: #{tpu_custom_call.1} parent=1 // pred_fallthru
      _
    %v36 = vlaneseq
    %v37 = vshrl.u32 %v36, 7
    %v38 = vlaneseq
    %v39 = vand.u32 %v38, 127
    %vm40 = vcmp.eq.s32.totalorder %v37, %v39
    %v41 = vld [vmem:[#allocation2] sm:$0xff]
    %vm42 = vcmask 523264
    %v44 = vsel %vm42, %v41, 0
    %46 = vmatprep.subr.mxu0 0.0
    %47 = vmatpush1.xpose.msra.mxu0 0.0
    %48 = vmatprep.subr.mxu0 0.0
    %49 = vmatpush1.xpose.msra.mxu0 0.0
    %50 = vmatprep.subr.mxu0 0.0
    %51 = vmatpush1.xpose.msra.mxu0 0.0
    %52 = vmatprep.subr.mxu0 0.0
    %53 = vmatpush1.xpose.msra.mxu0 0.0
    %54 = vmatprep.subr.mxu0 0.0
    %55 = vmatpush1.xpose.msra.mxu0 0.0
    %56 = vmatprep.subr.mxu0 0.0
    %57 = vmatpush1.xpose.msra.mxu0 0.0
    %58 = vmatprep.subr.mxu0 0.0
    %59 = vmatpush1.xpose.msra.mxu0 0.0
    %60 = vmatprep.subr.mxu0 0.0
    %61 = vmatpush1.xpose.msra.mxu0 0.0
    %62 = vmatprep.subr.mxu0 0.0
    %63 = vmatpush1.xpose.msra.mxu0 0.0
    %64 = vmatprep.subr.mxu0 0.0
    %65 = vmatpush1.xpose.msra.mxu0 0.0
    %66 = vmatprep.subr.mxu0 0.0
    %67 = vmatpush1.xpose.msra.mxu0 0.0
    %68 = vmatprep.subr.mxu0 0.0
    %69 = vmatpush1.xpose.msra.mxu0 0.0
    %70 = vmatprep.subr.mxu0 0.0
    %71 = vmatpush1.xpose.msra.mxu0 0.0
    %72 = vmatprep.subr.mxu0 0.0
    %73 = vmatpush1.xpose.msra.mxu0 0.0
    %74 = vmatprep.subr.mxu0 0.0
    %75 = vmatpush1.xpose.msra.mxu0 0.0
    %76 = vmatprep.subr.mxu0 0.0
    %77 = vmatpush1.xpose.msra.mxu0 %v44
    %78 = vmatprep.subr.mxu0 0.0
    %79 = vmatpush2.xpose.msra.mxu0 0.0
    %80 = vmatprep.subr.mxu0 0.0
    %81 = vmatpush2.xpose.msra.mxu0 0.0
    %82 = vmatprep.subr.mxu0 0.0
    %83 = vmatpush2.xpose.msra.mxu0 0.0
    %84 = vmatprep.subr.mxu0 0.0
    %85 = vmatpush2.xpose.msra.mxu0 0.0
    %86 = vmatprep.subr.mxu0 0.0
    %87 = vmatpush2.xpose.msra.mxu0 0.0
    %88 = vmatprep.subr.mxu0 0.0
    %89 = vmatpush2.xpose.msra.mxu0 0.0
    %90 = vmatprep.subr.mxu0 0.0
    %91 = vmatpush2.xpose.msra.mxu0 0.0
    %92 = vmatprep.subr.mxu0 0.0
    %93 = vmatpush2.xpose.msra.mxu0 0.0
    %94 = vmatprep.subr.mxu0 0.0
    %95 = vmatpush2.xpose.msra.mxu0 0.0
    %96 = vmatprep.subr.mxu0 0.0
    %97 = vmatpush2.xpose.msra.mxu0 0.0
    %98 = vmatprep.subr.mxu0 0.0
    %99 = vmatpush2.xpose.msra.mxu0 0.0
    %100 = vmatprep.subr.mxu0 0.0
    %101 = vmatpush2.xpose.msra.mxu0 0.0
    %102 = vmatprep.subr.mxu0 0.0
    %103 = vmatpush2.xpose.msra.mxu0 0.0
    %104 = vmatprep.subr.mxu0 0.0
    %105 = vmatpush2.xpose.msra.mxu0 0.0
    %106 = vmatprep.subr.mxu0 0.0
    %107 = vmatpush2.xpose.msra.mxu0 0.0
    %108 = vmatprep.subr.mxu0 0.0
    %109 = vmatpush2.xpose.msra.mxu0 0.0
    %110 = vmatprep.mubr.f32.mxu0 0.0
    %111 = vmatmul.mubr.f32.gmra.mxu0 %v44
    %v112 = vpop.f32.mrf.mxu0
    %v113 = vadd.f32 0.0, %v112
    %v114 = vpop.f32.mrf.mxu0
    %115 = vdwg.mxu0
    %v116 = vsel %vm40, %v113, 0.0
    %vm117 = vcmask 64512
    %v118 = vsel %vm117, %v116, 0.0
    %119 = vadd.xlane.f32.xlu0 %v118
    %v120 = vpop.xlane.xlu0 %119
    %v121 = vrot.slane %v118, 4
    %v122 = vadd.f32 %v118, %v121
    %v123 = vrot.slane %v122, 2
    %v124 = vadd.f32 %v122, %v123
    %v125 = vrot.slane %v124, 1
    %v126 = vadd.f32 %v124, %v125
    %v127 = vadd.f32 %v120, %v126
    %v128 = vmul.f32 %v113, 2.0
    %v129 = vsub.f32 %v127, %v128
    %v130 = vmax.f32 %v129, 0.0
    %v131 = vrsqrt.pop %v130
    %v132 = vmul.f32 %v130, %v131
    %vm133 = vcmp.eq.f32.partialorder %v130, inf
    %v134 = vsel %vm133, %v130, %v132
    %vm135 = vcmp.eq.f32.partialorder %v130, 0.0
    %v136 = vand.u32 %v130, 2147483648
    %v137 = vsel %vm135, %v136, %v134
    %v138 = vsel %vm40, 0.0, %v137
    %v139 = vsel %vm117, %v138, 0.0
    %140 = vadd.xlane.f32.xlu0 %v139
    %v141 = vpop.xlane.xlu0 %140
    %v142 = vrot.slane %v141, 4
    %v143 = vadd.f32 %v141, %v142
    %v144 = vrot.slane %v143, 2
    %v145 = vadd.f32 %v143, %v144
    %v146 = vrot.slane %v145, 1
    %v147 = vadd.f32 %v145, %v146
    %v148 = vmul.f32 %v147, 0.017857144
    %v149 = vmax.f32 %v148, 1e-12
    %v150 = vrcp.pop %v149
    %v151 = vmul.f32 1.0, %v150
    %v152 = vmul.f32 %v137, %v151
    %v153 = vld [vmem:[#allocation5] sm:$0xff]
    %vm154 = vcmask 261120
    %v156 = vsel %vm154, %v153, 0
    %158 = vmatprep.subr.mxu0 0.0
    %159 = vmatpush1.xpose.msra.mxu0 0.0
    %160 = vmatprep.subr.mxu0 0.0
    %161 = vmatpush1.xpose.msra.mxu0 0.0
    %162 = vmatprep.subr.mxu0 0.0
    %163 = vmatpush1.xpose.msra.mxu0 0.0
    %164 = vmatprep.subr.mxu0 0.0
    %165 = vmatpush1.xpose.msra.mxu0 0.0
    %166 = vmatprep.subr.mxu0 0.0
    %167 = vmatpush1.xpose.msra.mxu0 0.0
    %168 = vmatprep.subr.mxu0 0.0
    %169 = vmatpush1.xpose.msra.mxu0 0.0
    %170 = vmatprep.subr.mxu0 0.0
    %171 = vmatpush1.xpose.msra.mxu0 0.0
    %172 = vmatprep.subr.mxu0 0.0
    %173 = vmatpush1.xpose.msra.mxu0 0.0
    %174 = vmatprep.subr.mxu0 0.0
    %175 = vmatpush1.xpose.msra.mxu0 0.0
    %176 = vmatprep.subr.mxu0 0.0
    %177 = vmatpush1.xpose.msra.mxu0 0.0
    %178 = vmatprep.subr.mxu0 0.0
    %179 = vmatpush1.xpose.msra.mxu0 0.0
    %180 = vmatprep.subr.mxu0 0.0
    %181 = vmatpush1.xpose.msra.mxu0 0.0
    %182 = vmatprep.subr.mxu0 0.0
    %183 = vmatpush1.xpose.msra.mxu0 0.0
    %184 = vmatprep.subr.mxu0 0.0
    %185 = vmatpush1.xpose.msra.mxu0 0.0
    %186 = vmatprep.subr.mxu0 0.0
    %187 = vmatpush1.xpose.msra.mxu0 0.0
    %188 = vmatprep.subr.mxu0 0.0
    %189 = vmatpush1.xpose.msra.mxu0 %v156
    %190 = vmatprep.subr.mxu0 0.0
    %191 = vmatpush2.xpose.msra.mxu0 0.0
    %192 = vmatprep.subr.mxu0 0.0
    %193 = vmatpush2.xpose.msra.mxu0 0.0
    %194 = vmatprep.subr.mxu0 0.0
    %195 = vmatpush2.xpose.msra.mxu0 0.0
    %196 = vmatprep.subr.mxu0 0.0
    %197 = vmatpush2.xpose.msra.mxu0 0.0
    %198 = vmatprep.subr.mxu0 0.0
    %199 = vmatpush2.xpose.msra.mxu0 0.0
    %200 = vmatprep.subr.mxu0 0.0
    %201 = vmatpush2.xpose.msra.mxu0 0.0
    %202 = vmatprep.subr.mxu0 0.0
    %203 = vmatpush2.xpose.msra.mxu0 0.0
    %204 = vmatprep.subr.mxu0 0.0
    %205 = vmatpush2.xpose.msra.mxu0 0.0
    %206 = vmatprep.subr.mxu0 0.0
    %207 = vmatpush2.xpose.msra.mxu0 0.0
    %208 = vmatprep.subr.mxu0 0.0
    %209 = vmatpush2.xpose.msra.mxu0 0.0
    %210 = vmatprep.subr.mxu0 0.0
    %211 = vmatpush2.xpose.msra.mxu0 0.0
    %212 = vmatprep.subr.mxu0 0.0
    %213 = vmatpush2.xpose.msra.mxu0 0.0
    %214 = vmatprep.subr.mxu0 0.0
    %215 = vmatpush2.xpose.msra.mxu0 0.0
    %216 = vmatprep.subr.mxu0 0.0
    %217 = vmatpush2.xpose.msra.mxu0 0.0
    %218 = vmatprep.subr.mxu0 0.0
    %219 = vmatpush2.xpose.msra.mxu0 0.0
    %220 = vmatprep.subr.mxu0 0.0
    %221 = vmatpush2.xpose.msra.mxu0 0.0
    %222 = vmatprep.mubr.f32.mxu0 0.0
    %223 = vmatmul.mubr.f32.gmra.mxu0 %v156
    %v224 = vpop.f32.mrf.mxu0
    %v225 = vadd.f32 0.0, %v224
    %v226 = vpop.f32.mrf.mxu0
    %227 = vdwg.mxu0
    %v228 = vsel %vm40, %v225, 0.0
    %v229 = vsel %vm117, %v228, 0.0
    %230 = vadd.xlane.f32.xlu0 %v229
    %v231 = vpop.xlane.xlu0 %230
    %v232 = vrot.slane %v229, 4
    %v233 = vadd.f32 %v229, %v232
    %v234 = vrot.slane %v233, 2
    %v235 = vadd.f32 %v233, %v234
    %v236 = vrot.slane %v235, 1
    %v237 = vadd.f32 %v235, %v236
    %v238 = vmax.f32 %v231, 1e-12
    %v239 = vrsqrt.pop %v238
    %v240 = vmul.f32 %v225, %v239
    %v241 = vmax.f32 %v237, 1e-12
    %v242 = vrsqrt.pop %v241
    %v243 = vmul.f32 %v240, %v242
    %v244 = vmul.f32 %v243, 2.0
    %v245 = vsub.f32 2.0, %v244
    %v246 = vmax.f32 %v245, 0.0
    %v247 = vrsqrt.pop %v246
    %v248 = vmul.f32 %v246, %v247
    %vm249 = vcmp.eq.f32.partialorder %v246, inf
    %v250 = vsel %vm249, %v246, %v248
    %vm251 = vcmp.eq.f32.partialorder %v246, 0.0
    %v252 = vand.u32 %v246, 2147483648
    %v253 = vsel %vm251, %v252, %v250
    %vm254 = vcmp.eq.s32.totalorder %v37, 0
    %vm255 = vcmp.eq.s32.totalorder %v39, 0
    %v256 = vsel %vm254, %v152, 0.0
    %v257 = vsel %vm117, %v256, 0.0
    %v258 = vrot.slane %v257, 4
    %v259 = vadd.f32 %v257, %v258
    %v260 = vrot.slane %v259, 2
    %v261 = vadd.f32 %v259, %v260
    %v262 = vrot.slane %v261, 1
    %v263 = vadd.f32 %v261, %v262
    %v264 = vsel %vm255, %v152, 0.0
    %v265 = vsel %vm117, %v264, 0.0
    %266 = vadd.xlane.f32.xlu0 %v265
    %v267 = vpop.xlane.xlu0 %266
    %v268 = vsel %vm254, %v253, 0.0
    %v269 = vsel %vm117, %v268, 0.0
    %v270 = vrot.slane %v269, 4
    %v271 = vadd.f32 %v269, %v270
    %v272 = vrot.slane %v271, 2
    %v273 = vadd.f32 %v271, %v272
    %v274 = vrot.slane %v273, 1
    %v275 = vadd.f32 %v273, %v274
    %v276 = vsel %vm255, %v253, 0.0
    %v277 = vsel %vm117, %v276, 0.0
    %278 = vadd.xlane.f32.xlu0 %v277
    %v279 = vpop.xlane.xlu0 %278
    %v280 = vsub.f32 %v263, %v267
    %v281 = vsub.f32 %v275, %v279
    %v282 = vmul.f32 %v280, 2.0
    %v283 = vsub.f32 0.0, %v282
    %v284 = vmul.f32 %v283, 1.442695
    %v285 = vpow.pop %v284
    %v286 = vadd.f32 %v285, 1.0
    %v287 = vrcp.pop %v286
    %v288 = vmul.f32 1.0, %v287
    %v289 = vmax.f32 %v283, -27.631021
    %v290 = vmul.f32 %v289, 0.2
    %v291 = vsub.f32 %v280, %v281
    %v292 = vadd.f32 %v291, %v290
    %v293 = vmul.f32 %v292, 5.0
    %v294 = vmul.f32 %v293, 1.442695
    %v295 = vpow.pop %v294
    %v296 = vadd.f32 %v295, 1.0
    %v297 = vmax.f32 %v296, 1e-12
    %v298 = vlog2.pop %v297
    %v299 = vmul.f32 %v298, 0.6931472
    %v300 = vmul.f32 %v288, %v299
    %v301 = vsub.f32 1.0, %v288
    %v302 = vsub.f32 0.0, %v293
    %v303 = vmul.f32 %v302, 1.442695
    %v304 = vpow.pop %v303
    %v305 = vadd.f32 %v304, 1.0
    %v306 = vmax.f32 %v305, 1e-12
    %v307 = vlog2.pop %v306
    %v308 = vmul.f32 %v307, 0.6931472
    %v309 = vmul.f32 %v301, %v308
    %v310 = vadd.f32 %v300, %v309
    %v311 = vsel %vm117, %v310, 0.0
    %312 = vadd.xlane.f32.xlu0 %v311
    %v313 = vpop.xlane.xlu0 %312
    %v314 = vrot.slane %v313, 4
    %v315 = vadd.f32 %v313, %v314
    %v316 = vrot.slane %v315, 2
    %v317 = vadd.f32 %v315, %v316
    %v318 = vrot.slane %v317, 1
    %v319 = vadd.f32 %v317, %v318
    %v320 = vadd.f32 %v319, 0.0
    %vm321 = vcmp.eq.s32.totalorder %v37, 1
    %vm322 = vcmp.eq.s32.totalorder %v39, 1
    %v323 = vsel %vm321, %v152, 0.0
    %v324 = vsel %vm117, %v323, 0.0
    %v325 = vrot.slane %v324, 4
    %v326 = vadd.f32 %v324, %v325
    %v327 = vrot.slane %v326, 2
    %v328 = vadd.f32 %v326, %v327
    %v329 = vrot.slane %v328, 1
    %v330 = vadd.f32 %v328, %v329
    %v331 = vsel %vm322, %v152, 0.0
    %v332 = vsel %vm117, %v331, 0.0
    %333 = vadd.xlane.f32.xlu0 %v332
    %v334 = vpop.xlane.xlu0 %333
    %v335 = vsel %vm321, %v253, 0.0
    %v336 = vsel %vm117, %v335, 0.0
    %v337 = vrot.slane %v336, 4
    %v338 = vadd.f32 %v336, %v337
    %v339 = vrot.slane %v338, 2
    %v340 = vadd.f32 %v338, %v339
    %v341 = vrot.slane %v340, 1
    %v342 = vadd.f32 %v340, %v341
    %v343 = vsel %vm322, %v253, 0.0
    %v344 = vsel %vm117, %v343, 0.0
    %345 = vadd.xlane.f32.xlu0 %v344
    %v346 = vpop.xlane.xlu0 %345
    %v347 = vsub.f32 %v330, %v334
    %v348 = vsub.f32 %v342, %v346
    %v349 = vmul.f32 %v347, 2.0
    %v350 = vsub.f32 0.0, %v349
    %v351 = vmul.f32 %v350, 1.442695
    %v352 = vpow.pop %v351
    %v353 = vadd.f32 %v352, 1.0
    %v354 = vrcp.pop %v353
    %v355 = vmul.f32 1.0, %v354
    %v356 = vmax.f32 %v350, -27.631021
    %v357 = vmul.f32 %v356, 0.2
    %v358 = vsub.f32 %v347, %v348
    %v359 = vadd.f32 %v358, %v357
    %v360 = vmul.f32 %v359, 5.0
    %v361 = vmul.f32 %v360, 1.442695
    %v362 = vpow.pop %v361
    %v363 = vadd.f32 %v362, 1.0
    %v364 = vmax.f32 %v363, 1e-12
    %v365 = vlog2.pop %v364
    %v366 = vmul.f32 %v365, 0.6931472
    %v367 = vmul.f32 %v355, %v366
    %v368 = vsub.f32 1.0, %v355
    %v369 = vsub.f32 0.0, %v360
    %v370 = vmul.f32 %v369, 1.442695
    %v371 = vpow.pop %v370
    %v372 = vadd.f32 %v371, 1.0
    %v373 = vmax.f32 %v372, 1e-12
    %v374 = vlog2.pop %v373
    %v375 = vmul.f32 %v374, 0.6931472
    %v376 = vmul.f32 %v368, %v375
    %v377 = vadd.f32 %v367, %v376
    %v378 = vsel %vm117, %v377, 0.0
    %379 = vadd.xlane.f32.xlu0 %v378
    %v380 = vpop.xlane.xlu0 %379
    %v381 = vrot.slane %v380, 4
    %v382 = vadd.f32 %v380, %v381
    %v383 = vrot.slane %v382, 2
    %v384 = vadd.f32 %v382, %v383
    %v385 = vrot.slane %v384, 1
    %v386 = vadd.f32 %v384, %v385
    %v387 = vadd.f32 %v320, %v386
    %vm388 = vcmp.eq.s32.totalorder %v37, 2
    %vm389 = vcmp.eq.s32.totalorder %v39, 2
    %v390 = vsel %vm388, %v152, 0.0
    %v391 = vsel %vm117, %v390, 0.0
    %v392 = vrot.slane %v391, 4
    %v393 = vadd.f32 %v391, %v392
    %v394 = vrot.slane %v393, 2
    %v395 = vadd.f32 %v393, %v394
    %v396 = vrot.slane %v395, 1
    %v397 = vadd.f32 %v395, %v396
    %v398 = vsel %vm389, %v152, 0.0
    %v399 = vsel %vm117, %v398, 0.0
    %400 = vadd.xlane.f32.xlu0 %v399
    %v401 = vpop.xlane.xlu0 %400
    %v402 = vsel %vm388, %v253, 0.0
    %v403 = vsel %vm117, %v402, 0.0
    %v404 = vrot.slane %v403, 4
    %v405 = vadd.f32 %v403, %v404
    %v406 = vrot.slane %v405, 2
    %v407 = vadd.f32 %v405, %v406
    %v408 = vrot.slane %v407, 1
    %v409 = vadd.f32 %v407, %v408
    %v410 = vsel %vm389, %v253, 0.0
    %v411 = vsel %vm117, %v410, 0.0
    %412 = vadd.xlane.f32.xlu0 %v411
    %v413 = vpop.xlane.xlu0 %412
    %v414 = vsub.f32 %v397, %v401
    %v415 = vsub.f32 %v409, %v413
    %v416 = vmul.f32 %v414, 2.0
    %v417 = vsub.f32 0.0, %v416
    %v418 = vmul.f32 %v417, 1.442695
    %v419 = vpow.pop %v418
    %v420 = vadd.f32 %v419, 1.0
    %v421 = vrcp.pop %v420
    %v422 = vmul.f32 1.0, %v421
    %v423 = vmax.f32 %v417, -27.631021
    %v424 = vmul.f32 %v423, 0.2
    %v425 = vsub.f32 %v414, %v415
    %v426 = vadd.f32 %v425, %v424
    %v427 = vmul.f32 %v426, 5.0
    %v428 = vmul.f32 %v427, 1.442695
    %v429 = vpow.pop %v428
    %v430 = vadd.f32 %v429, 1.0
    %v431 = vmax.f32 %v430, 1e-12
    %v432 = vlog2.pop %v431
    %v433 = vmul.f32 %v432, 0.6931472
    %v434 = vmul.f32 %v422, %v433
    %v435 = vsub.f32 1.0, %v422
    %v436 = vsub.f32 0.0, %v427
    %v437 = vmul.f32 %v436, 1.442695
    %v438 = vpow.pop %v437
    %v439 = vadd.f32 %v438, 1.0
    %v440 = vmax.f32 %v439, 1e-12
    %v441 = vlog2.pop %v440
    %v442 = vmul.f32 %v441, 0.6931472
    %v443 = vmul.f32 %v435, %v442
    %v444 = vadd.f32 %v434, %v443
    %v445 = vsel %vm117, %v444, 0.0
    %446 = vadd.xlane.f32.xlu0 %v445
    %v447 = vpop.xlane.xlu0 %446
    %v448 = vrot.slane %v447, 4
    %v449 = vadd.f32 %v447, %v448
    %v450 = vrot.slane %v449, 2
    %v451 = vadd.f32 %v449, %v450
    %v452 = vrot.slane %v451, 1
    %v453 = vadd.f32 %v451, %v452
    %v454 = vadd.f32 %v387, %v453
    %vm455 = vcmp.eq.s32.totalorder %v37, 3
    %vm456 = vcmp.eq.s32.totalorder %v39, 3
    %v457 = vsel %vm455, %v152, 0.0
    %v458 = vsel %vm117, %v457, 0.0
    %v459 = vrot.slane %v458, 4
    %v460 = vadd.f32 %v458, %v459
    %v461 = vrot.slane %v460, 2
    %v462 = vadd.f32 %v460, %v461
    %v463 = vrot.slane %v462, 1
    %v464 = vadd.f32 %v462, %v463
    %v465 = vsel %vm456, %v152, 0.0
    %v466 = vsel %vm117, %v465, 0.0
    %467 = vadd.xlane.f32.xlu0 %v466
    %v468 = vpop.xlane.xlu0 %467
    %v469 = vsel %vm455, %v253, 0.0
    %v470 = vsel %vm117, %v469, 0.0
    %v471 = vrot.slane %v470, 4
    %v472 = vadd.f32 %v470, %v471
    %v473 = vrot.slane %v472, 2
    %v474 = vadd.f32 %v472, %v473
    %v475 = vrot.slane %v474, 1
    %v476 = vadd.f32 %v474, %v475
    %v477 = vsel %vm456, %v253, 0.0
    %v478 = vsel %vm117, %v477, 0.0
    %479 = vadd.xlane.f32.xlu0 %v478
    %v480 = vpop.xlane.xlu0 %479
    %v481 = vsub.f32 %v464, %v468
    %v482 = vsub.f32 %v476, %v480
    %v483 = vmul.f32 %v481, 2.0
    %v484 = vsub.f32 0.0, %v483
    %v485 = vmul.f32 %v484, 1.442695
    %v486 = vpow.pop %v485
    %v487 = vadd.f32 %v486, 1.0
    %v488 = vrcp.pop %v487
    %v489 = vmul.f32 1.0, %v488
    %v490 = vmax.f32 %v484, -27.631021
    %v491 = vmul.f32 %v490, 0.2
    %v492 = vsub.f32 %v481, %v482
    %v493 = vadd.f32 %v492, %v491
    %v494 = vmul.f32 %v493, 5.0
    %v495 = vmul.f32 %v494, 1.442695
    %v496 = vpow.pop %v495
    %v497 = vadd.f32 %v496, 1.0
    %v498 = vmax.f32 %v497, 1e-12
    %v499 = vlog2.pop %v498
    %v500 = vmul.f32 %v499, 0.6931472
    %v501 = vmul.f32 %v489, %v500
    %v502 = vsub.f32 1.0, %v489
    %v503 = vsub.f32 0.0, %v494
    %v504 = vmul.f32 %v503, 1.442695
    %v505 = vpow.pop %v504
    %v506 = vadd.f32 %v505, 1.0
    %v507 = vmax.f32 %v506, 1e-12
    %v508 = vlog2.pop %v507
    %v509 = vmul.f32 %v508, 0.6931472
    %v510 = vmul.f32 %v502, %v509
    %v511 = vadd.f32 %v501, %v510
    %v512 = vsel %vm117, %v511, 0.0
    %513 = vadd.xlane.f32.xlu0 %v512
    %v514 = vpop.xlane.xlu0 %513
    %v515 = vrot.slane %v514, 4
    %v516 = vadd.f32 %v514, %v515
    %v517 = vrot.slane %v516, 2
    %v518 = vadd.f32 %v516, %v517
    %v519 = vrot.slane %v518, 1
    %v520 = vadd.f32 %v518, %v519
    %v521 = vadd.f32 %v454, %v520
    %vm522 = vcmp.eq.s32.totalorder %v37, 4
    %vm523 = vcmp.eq.s32.totalorder %v39, 4
    %v524 = vsel %vm522, %v152, 0.0
    %v525 = vsel %vm117, %v524, 0.0
    %v526 = vrot.slane %v525, 4
    %v527 = vadd.f32 %v525, %v526
    %v528 = vrot.slane %v527, 2
    %v529 = vadd.f32 %v527, %v528
    %v530 = vrot.slane %v529, 1
    %v531 = vadd.f32 %v529, %v530
    %v532 = vsel %vm523, %v152, 0.0
    %v533 = vsel %vm117, %v532, 0.0
    %534 = vadd.xlane.f32.xlu0 %v533
    %v535 = vpop.xlane.xlu0 %534
    %v536 = vsel %vm522, %v253, 0.0
    %v537 = vsel %vm117, %v536, 0.0
    %v538 = vrot.slane %v537, 4
    %v539 = vadd.f32 %v537, %v538
    %v540 = vrot.slane %v539, 2
    %v541 = vadd.f32 %v539, %v540
    %v542 = vrot.slane %v541, 1
    %v543 = vadd.f32 %v541, %v542
    %v544 = vsel %vm523, %v253, 0.0
    %v545 = vsel %vm117, %v544, 0.0
    %546 = vadd.xlane.f32.xlu0 %v545
    %v547 = vpop.xlane.xlu0 %546
    %v548 = vsub.f32 %v531, %v535
    %v549 = vsub.f32 %v543, %v547
    %v550 = vmul.f32 %v548, 2.0
    %v551 = vsub.f32 0.0, %v550
    %v552 = vmul.f32 %v551, 1.442695
    %v553 = vpow.pop %v552
    %v554 = vadd.f32 %v553, 1.0
    %v555 = vrcp.pop %v554
    %v556 = vmul.f32 1.0, %v555
    %v557 = vmax.f32 %v551, -27.631021
    %v558 = vmul.f32 %v557, 0.2
    %v559 = vsub.f32 %v548, %v549
    %v560 = vadd.f32 %v559, %v558
    %v561 = vmul.f32 %v560, 5.0
    %v562 = vmul.f32 %v561, 1.442695
    %v563 = vpow.pop %v562
    %v564 = vadd.f32 %v563, 1.0
    %v565 = vmax.f32 %v564, 1e-12
    %v566 = vlog2.pop %v565
    %v567 = vmul.f32 %v566, 0.6931472
    %v568 = vmul.f32 %v556, %v567
    %v569 = vsub.f32 1.0, %v556
    %v570 = vsub.f32 0.0, %v561
    %v571 = vmul.f32 %v570, 1.442695
    %v572 = vpow.pop %v571
    %v573 = vadd.f32 %v572, 1.0
    %v574 = vmax.f32 %v573, 1e-12
    %v575 = vlog2.pop %v574
    %v576 = vmul.f32 %v575, 0.6931472
    %v577 = vmul.f32 %v569, %v576
    %v578 = vadd.f32 %v568, %v577
    %v579 = vsel %vm117, %v578, 0.0
    %580 = vadd.xlane.f32.xlu0 %v579
    %v581 = vpop.xlane.xlu0 %580
    %v582 = vrot.slane %v581, 4
    %v583 = vadd.f32 %v581, %v582
    %v584 = vrot.slane %v583, 2
    %v585 = vadd.f32 %v583, %v584
    %v586 = vrot.slane %v585, 1
    %v587 = vadd.f32 %v585, %v586
    %v588 = vadd.f32 %v521, %v587
    %vm589 = vcmp.eq.s32.totalorder %v37, 5
    %vm590 = vcmp.eq.s32.totalorder %v39, 5
    %v591 = vsel %vm589, %v152, 0.0
    %v592 = vsel %vm117, %v591, 0.0
    %v593 = vrot.slane %v592, 4
    %v594 = vadd.f32 %v592, %v593
    %v595 = vrot.slane %v594, 2
    %v596 = vadd.f32 %v594, %v595
    %v597 = vrot.slane %v596, 1
    %v598 = vadd.f32 %v596, %v597
    %v599 = vsel %vm590, %v152, 0.0
    %v600 = vsel %vm117, %v599, 0.0
    %601 = vadd.xlane.f32.xlu0 %v600
    %v602 = vpop.xlane.xlu0 %601
    %v603 = vsel %vm589, %v253, 0.0
    %v604 = vsel %vm117, %v603, 0.0
    %v605 = vrot.slane %v604, 4
    %v606 = vadd.f32 %v604, %v605
    %v607 = vrot.slane %v606, 2
    %v608 = vadd.f32 %v606, %v607
    %v609 = vrot.slane %v608, 1
    %v610 = vadd.f32 %v608, %v609
    %v611 = vsel %vm590, %v253, 0.0
    %v612 = vsel %vm117, %v611, 0.0
    %613 = vadd.xlane.f32.xlu0 %v612
    %v614 = vpop.xlane.xlu0 %613
    %v615 = vsub.f32 %v598, %v602
    %v616 = vsub.f32 %v610, %v614
    %v617 = vmul.f32 %v615, 2.0
    %v618 = vsub.f32 0.0, %v617
    %v619 = vmul.f32 %v618, 1.442695
    %v620 = vpow.pop %v619
    %v621 = vadd.f32 %v620, 1.0
    %v622 = vrcp.pop %v621
    %v623 = vmul.f32 1.0, %v622
    %v624 = vmax.f32 %v618, -27.631021
    %v625 = vmul.f32 %v624, 0.2
    %v626 = vsub.f32 %v615, %v616
    %v627 = vadd.f32 %v626, %v625
    %v628 = vmul.f32 %v627, 5.0
    %v629 = vmul.f32 %v628, 1.442695
    %v630 = vpow.pop %v629
    %v631 = vadd.f32 %v630, 1.0
    %v632 = vmax.f32 %v631, 1e-12
    %v633 = vlog2.pop %v632
    %v634 = vmul.f32 %v633, 0.6931472
    %v635 = vmul.f32 %v623, %v634
    %v636 = vsub.f32 1.0, %v623
    %v637 = vsub.f32 0.0, %v628
    %v638 = vmul.f32 %v637, 1.442695
    %v639 = vpow.pop %v638
    %v640 = vadd.f32 %v639, 1.0
    %v641 = vmax.f32 %v640, 1e-12
    %v642 = vlog2.pop %v641
    %v643 = vmul.f32 %v642, 0.6931472
    %v644 = vmul.f32 %v636, %v643
    %v645 = vadd.f32 %v635, %v644
    %v646 = vsel %vm117, %v645, 0.0
    %647 = vadd.xlane.f32.xlu0 %v646
    %v648 = vpop.xlane.xlu0 %647
    %v649 = vrot.slane %v648, 4
    %v650 = vadd.f32 %v648, %v649
    %v651 = vrot.slane %v650, 2
    %v652 = vadd.f32 %v650, %v651
    %v653 = vrot.slane %v652, 1
    %v654 = vadd.f32 %v652, %v653
    %v655 = vadd.f32 %v588, %v654
    %vm656 = vcmp.eq.s32.totalorder %v37, 6
    %vm657 = vcmp.eq.s32.totalorder %v39, 6
    %v658 = vsel %vm656, %v152, 0.0
    %v659 = vsel %vm117, %v658, 0.0
    %v660 = vrot.slane %v659, 4
    %v661 = vadd.f32 %v659, %v660
    %v662 = vrot.slane %v661, 2
    %v663 = vadd.f32 %v661, %v662
    %v664 = vrot.slane %v663, 1
    %v665 = vadd.f32 %v663, %v664
    %v666 = vsel %vm657, %v152, 0.0
    %v667 = vsel %vm117, %v666, 0.0
    %668 = vadd.xlane.f32.xlu0 %v667
    %v669 = vpop.xlane.xlu0 %668
    %v670 = vsel %vm656, %v253, 0.0
    %v671 = vsel %vm117, %v670, 0.0
    %v672 = vrot.slane %v671, 4
    %v673 = vadd.f32 %v671, %v672
    %v674 = vrot.slane %v673, 2
    %v675 = vadd.f32 %v673, %v674
    %v676 = vrot.slane %v675, 1
    %v677 = vadd.f32 %v675, %v676
    %v678 = vsel %vm657, %v253, 0.0
    %v679 = vsel %vm117, %v678, 0.0
    %680 = vadd.xlane.f32.xlu0 %v679
    %v681 = vpop.xlane.xlu0 %680
    %v682 = vsub.f32 %v665, %v669
    %v683 = vsub.f32 %v677, %v681
    %v684 = vmul.f32 %v682, 2.0
    %v685 = vsub.f32 0.0, %v684
    %v686 = vmul.f32 %v685, 1.442695
    %v687 = vpow.pop %v686
    %v688 = vadd.f32 %v687, 1.0
    %v689 = vrcp.pop %v688
    %v690 = vmul.f32 1.0, %v689
    %v691 = vmax.f32 %v685, -27.631021
    %v692 = vmul.f32 %v691, 0.2
    %v693 = vsub.f32 %v682, %v683
    %v694 = vadd.f32 %v693, %v692
    %v695 = vmul.f32 %v694, 5.0
    %v696 = vmul.f32 %v695, 1.442695
    %v697 = vpow.pop %v696
    %v698 = vadd.f32 %v697, 1.0
    %v699 = vmax.f32 %v698, 1e-12
    %v700 = vlog2.pop %v699
    %v701 = vmul.f32 %v700, 0.6931472
    %v702 = vmul.f32 %v690, %v701
    %v703 = vsub.f32 1.0, %v690
    %v704 = vsub.f32 0.0, %v695
    %v705 = vmul.f32 %v704, 1.442695
    %v706 = vpow.pop %v705
    %v707 = vadd.f32 %v706, 1.0
    %v708 = vmax.f32 %v707, 1e-12
    %v709 = vlog2.pop %v708
    %v710 = vmul.f32 %v709, 0.6931472
    %v711 = vmul.f32 %v703, %v710
    %v712 = vadd.f32 %v702, %v711
    %v713 = vsel %vm117, %v712, 0.0
    %714 = vadd.xlane.f32.xlu0 %v713
    %v715 = vpop.xlane.xlu0 %714
    %v716 = vrot.slane %v715, 4
    %v717 = vadd.f32 %v715, %v716
    %v718 = vrot.slane %v717, 2
    %v719 = vadd.f32 %v717, %v718
    %v720 = vrot.slane %v719, 1
    %v721 = vadd.f32 %v719, %v720
    %v722 = vadd.f32 %v655, %v721
    %vm723 = vcmp.eq.s32.totalorder %v37, 7
    %vm724 = vcmp.eq.s32.totalorder %v39, 7
    %v725 = vsel %vm723, %v152, 0.0
    %v726 = vsel %vm117, %v725, 0.0
    %v727 = vrot.slane %v726, 4
    %v728 = vadd.f32 %v726, %v727
    %v729 = vrot.slane %v728, 2
    %v730 = vadd.f32 %v728, %v729
    %v731 = vrot.slane %v730, 1
    %v732 = vadd.f32 %v730, %v731
    %v733 = vsel %vm724, %v152, 0.0
    %v734 = vsel %vm117, %v733, 0.0
    %735 = vadd.xlane.f32.xlu0 %v734
    %v736 = vpop.xlane.xlu0 %735
    %v737 = vsel %vm723, %v253, 0.0
    %v738 = vsel %vm117, %v737, 0.0
    %v739 = vrot.slane %v738, 4
    %v740 = vadd.f32 %v738, %v739
    %v741 = vrot.slane %v740, 2
    %v742 = vadd.f32 %v740, %v741
    %v743 = vrot.slane %v742, 1
    %v744 = vadd.f32 %v742, %v743
    %v745 = vsel %vm724, %v253, 0.0
    %v746 = vsel %vm117, %v745, 0.0
    %747 = vadd.xlane.f32.xlu0 %v746
    %v748 = vpop.xlane.xlu0 %747
    %v749 = vsub.f32 %v732, %v736
    %v750 = vsub.f32 %v744, %v748
    %v751 = vmul.f32 %v749, 2.0
    %v752 = vsub.f32 0.0, %v751
    %v753 = vmul.f32 %v752, 1.442695
    %v754 = vpow.pop %v753
    %v755 = vadd.f32 %v754, 1.0
    %v756 = vrcp.pop %v755
    %v757 = vmul.f32 1.0, %v756
    %v758 = vmax.f32 %v752, -27.631021
    %v759 = vmul.f32 %v758, 0.2
    %v760 = vsub.f32 %v749, %v750
    %v761 = vadd.f32 %v760, %v759
    %v762 = vmul.f32 %v761, 5.0
    %v763 = vmul.f32 %v762, 1.442695
    %v764 = vpow.pop %v763
    %v765 = vadd.f32 %v764, 1.0
    %v766 = vmax.f32 %v765, 1e-12
    %v767 = vlog2.pop %v766
    %v768 = vmul.f32 %v767, 0.6931472
    %v769 = vmul.f32 %v757, %v768
    %v770 = vsub.f32 1.0, %v757
    %v771 = vsub.f32 0.0, %v762
    %v772 = vmul.f32 %v771, 1.442695
    %v773 = vpow.pop %v772
    %v774 = vadd.f32 %v773, 1.0
    %v775 = vmax.f32 %v774, 1e-12
    %v776 = vlog2.pop %v775
    %v777 = vmul.f32 %v776, 0.6931472
    %v778 = vmul.f32 %v770, %v777
    %v779 = vadd.f32 %v769, %v778
    %v780 = vsel %vm117, %v779, 0.0
    %781 = vadd.xlane.f32.xlu0 %v780
    %v782 = vpop.xlane.xlu0 %781
    %v783 = vrot.slane %v782, 4
    %v784 = vadd.f32 %v782, %v783
    %v785 = vrot.slane %v784, 2
    %v786 = vadd.f32 %v784, %v785
    %v787 = vrot.slane %v786, 1
    %v788 = vadd.f32 %v786, %v787
    %v789 = vadd.f32 %v722, %v788
    %v790 = vmul.f32 %v789, 0.000390625
    %vm791 = vcmask 0
    %792 = vst.msk [vmem:[#allocation7] sm:$0x1] %vm791, %v790
    // Predicated region
    $region18: #{tpu_custom_call.1} parent=1 // pred_check
      _
    $region19: #{tpu_custom_call.1} parent=1 // pred_check_branch
      %794 = sbr.rel (0) target = $region21
    $region20: #{tpu_custom_call.1} parent=1 // pred_region
      %s796 = ssub.s32 16, 16
      %797 = vsyncadd [#allocation4], %s796
      %s799 = sshll.u32 [#allocation7], 4
      %s800 = int_to_ptr.vmem [resolvable:$true] %s799
      %802 = dma.vmem_to_hbm [thread:$0]  %s800, 16, %s2, [#allocation4]
    $region21: #{tpu_custom_call.1} parent=1 // pred_fallthru
      _
    // Predicated region
    $region22: #{tpu_custom_call.1} parent=1 // pred_check
      _
    $region23: #{tpu_custom_call.1} parent=1 // pred_check_branch
      %804 = sbr.rel (0) target = $region25
    $region24: #{tpu_custom_call.1} parent=1 // pred_region
      %805 = dma.done [#allocation4], 16
    $region25: #{tpu_custom_call.1} parent=1 // pred_fallthru
      _
    %806 = vsyncpa [#allocation3], 1
    %807 = vsyncpa [#allocation6], 1
    %808 = vsyncpa [#allocation4], 1

</llo_original>
